<compile_context>
chip_gen: v5e
topology: v5e:2x2
jax: 0.10.0
libtpu: 0.0.40
codegen_flags: <defaults>
</compile_context>

<pallas_src>
import functools

import jax
import jax.numpy as jnp
from jax.experimental import pallas as pl
from jax.experimental.pallas import tpu as pltpu

LN_EPS = 1e-5  # torch.nn.LayerNorm default

# Flipped to False the first time pipeline_mode=pl.Buffered(1) is rejected by
# the installed Pallas/Mosaic version; later calls skip the attempt.
_BUFFERED_WEIGHTS_OK = True


def _round_up(x, m):
    return (x + m - 1) // m * m


def _pad_to(x, shape):
    pads = [(0, s - d) for d, s in zip(x.shape, shape)]
    if all(p == (0, 0) for p in pads):
        return x
    return jnp.pad(x, pads)


def _device_kind():
    try:
        return jax.devices()[0].device_kind.lower()
    except Exception:
        return ""


def _vmem_capacity_bytes():
    try:
        return int(pltpu.get_tpu_info().vmem_capacity_bytes)
    except Exception:
        return (64 << 20) if "v7" in _device_kind() else (128 << 20)


def _default_row_tile():
    kind = _device_kind()
    if "v6" in kind or "v7" in kind:
        return 512  # 2x256^2 MXU: two full M passes per weight residency
    return 256      # v5e 4x128^2 MXU; bigger tiles only add spill pressure


def _min_grid_steps():
    # v7x has two TensorCores per chip; the "parallel" row axis needs >= 2
    # grid steps to feed both.
    return 2 if "v7" in _device_kind() else 1


def _choose_row_tile(n_rows, row_tile, min_steps):
    n8 = _round_up(max(n_rows, 1), 8)
    tile = min(_round_up(row_tile, 8), n8)

    def waste(t):
        padded = _round_up(n_rows, t)
        return (padded - n_rows) / padded

    # Shrink while row-padding waste exceeds ~12.5% (wasted MXU + HBM work).
    while tile > 8 and waste(tile) > 0.125:
        tile = _round_up(tile // 2, 8)
    # Ensure enough grid steps so every TensorCore gets work.
    while tile > 8 and _round_up(n_rows, tile) // tile < min_steps:
        tile = _round_up(tile // 2, 8)
    return tile


def _visual_reconstructor_kernel(
    # activations (tiled over rows)
    text_ref, layout_ref,
    # text_encoder params
    wt_ref, bt_ref, gt_ref, bnt_ref,
    # layout_encoder params
    wl_ref, bl_ref, gl_ref, bnl_ref,
    # fusion params (first linear split into text/layout halves -> no concat)
    wf1t_ref, wf1l_ref, bf1_ref, gf_ref, bnf_ref,
    wf2_ref, bf2_ref,
    # output
    out_ref,
    *, n_valid, matmul_dtype,
):
    inv_n = 1.0 / n_valid

    def ln_relu(x, g, b):
        # x is f32; padded lanes are exactly zero (zero weight columns / zero
        # bias) so sums over the full padded lane width equal sums over the
        # true feature count.  gamma/beta padding is zero -> padded lanes
        # stay exactly zero through the whole network.
        s = jnp.sum(x, axis=-1, keepdims=True)
        s2 = jnp.sum(x * x, axis=-1, keepdims=True)
        mu = s * inv_n
        var = jnp.maximum(s2 * inv_n - mu * mu, 0.0)
        y = (x - mu) * jax.lax.rsqrt(var + LN_EPS) * g + b
        # ReLU, then hand the next matmul its operand dtype directly (keeps
        # the inter-stage [tile, V] intermediates at half width).
        return jnp.maximum(y, 0.0).astype(matmul_dtype)

    # In-kernel cast of activations (VPU work hidden under the MXU matmuls).
    tx = text_ref[...].astype(matmul_dtype)
    lx = layout_ref[...].astype(matmul_dtype)

    # text_encoder: Linear -> LayerNorm -> ReLU -> Dropout(identity)
    tv = ln_relu(
        jnp.dot(tx, wt_ref[...], preferred_element_type=jnp.float32) + bt_ref[...],
        gt_ref[...], bnt_ref[...])

    # layout_encoder: Linear -> LayerNorm -> ReLU -> Dropout(identity)
    lv = ln_relu(
        jnp.dot(lx, wl_ref[...], preferred_element_type=jnp.float32) + bl_ref[...],
        gl_ref[...], bnl_ref[...])

    # fusion: Linear(cat([tv, lv])) == tv @ Wf1[:V] + lv @ Wf1[V:]
    h = ln_relu(
        jnp.dot(tv, wf1t_ref[...], preferred_element_type=jnp.float32)
        + jnp.dot(lv, wf1l_ref[...], preferred_element_type=jnp.float32)
        + bf1_ref[...],
        gf_ref[...], bnf_ref[...])

    # final Linear(V -> V)
    out = jnp.dot(h, wf2_ref[...], preferred_element_type=jnp.float32) + bf2_ref[...]
    out_ref[...] = out.astype(out_ref.dtype)


def prepare_params(params, matmul_dtype=jnp.bfloat16):
    """Pad weights to lane-dense (multiple-of-128) shapes and cast matmul
    operands ONCE; the result is reused across forward calls (no per-call
    host pad/convert pass over the weights)."""
    text_dim, visual_dim = params["wt"].shape
    layout_dim = params["wl"].shape[0]
    tp = _round_up(text_dim, 128)
    lp = _round_up(layout_dim, 128)
    vp = _round_up(visual_dim, 128)

    def pad_w(w, rows, cols):
        return _pad_to(w, (rows, cols)).astype(matmul_dtype)

    def pad_v(v):  # (1, V) row vectors used in elementwise math stay f32
        return _pad_to(v.reshape(1, -1), (1, vp)).astype(jnp.float32)

    weights = (
        pad_w(params["wt"], tp, vp), pad_v(params["bt"]),
        pad_v(params["gt"]), pad_v(params["bnt"]),
        pad_w(params["wl"], lp, vp), pad_v(params["bl"]),
        pad_v(params["gl"]), pad_v(params["bnl"]),
        pad_w(params["wf1t"], vp, vp), pad_w(params["wf1l"], vp, vp),
        pad_v(params["bf1"]), pad_v(params["gf"]), pad_v(params["bnf"]),
        pad_w(params["wf2"], vp, vp), pad_v(params["bf2"]),
    )
    meta = dict(text_dim=text_dim, layout_dim=layout_dim, visual_dim=visual_dim,
                tp=tp, lp=lp, vp=vp, matmul_dtype=jnp.dtype(matmul_dtype))
    return {"weights": weights, "meta": meta}
    # TODO(synk): on v7x, optionally store the V x V weights as fp8 to halve
    # resident weight VMEM again (validate accuracy first).


def visual_reconstructor_forward(text_features, layout_features, prepared, *,
                                 row_tile=None, out_dtype=jnp.bfloat16):
    """text_features: [N, text_dim]; layout_features: [N, layout_dim]
    -> [N, visual_dim] in `out_dtype`.  `prepared` comes from prepare_params().
    """
    global _BUFFERED_WEIGHTS_OK

    meta = prepared["meta"]
    weights = prepared["weights"]
    text_dim, layout_dim = meta["text_dim"], meta["layout_dim"]
    visual_dim = meta["visual_dim"]
    tp, lp, vp = meta["tp"], meta["lp"], meta["vp"]
    matmul_dtype = meta["matmul_dtype"]

    n_rows, td = text_features.shape
    n_rows_l, ld = layout_features.shape
    assert n_rows == n_rows_l and td == text_dim and ld == layout_dim

    if row_tile is None:
        row_tile = _default_row_tile()
    eff_tile = _choose_row_tile(n_rows, row_tile, _min_grid_steps())
    rows_p = _round_up(n_rows, eff_tile)
    grid = (rows_p // eff_tile,)

    # Activations: pad only (no separate host dtype round trip); the cast to
    # the matmul dtype happens inside the kernel.
    text_p = _pad_to(text_features, (rows_p, tp))
    layout_p = _pad_to(layout_features, (rows_p, lp))

    act_isize = jnp.dtype(text_p.dtype).itemsize
    mm_isize = jnp.dtype(matmul_dtype).itemsize
    out_isize = jnp.dtype(out_dtype).itemsize

    w_bytes = (tp * vp + lp * vp + 3 * vp * vp) * mm_isize + 8 * vp * 4

    kernel = functools.partial(_visual_reconstructor_kernel,
                               n_valid=float(visual_dim),
                               matmul_dtype=matmul_dtype)

    flops = 2 * rows_p * (tp * vp + lp * vp + 3 * vp * vp)
    bytes_accessed = int(rows_p * (tp + lp) * act_isize + w_bytes
                         + rows_p * vp * out_isize)
    cost = pl.CostEstimate(flops=flops, transcendentals=3 * rows_p,
                           bytes_accessed=bytes_accessed)

    def run(buffer_weights_once):
        def row_spec(cols):
            return pl.BlockSpec((eff_tile, cols), lambda i: (i, 0))

        def const_spec(shape):
            if buffer_weights_once:
                # Constant block index across the grid -> a single buffer is
                # enough; halves the resident weight VMEM.
                return pl.BlockSpec(shape, lambda i: (0,) * len(shape),
                                    pipeline_mode=pl.Buffered(1))
            return pl.BlockSpec(shape, lambda i: (0,) * len(shape))

        in_specs = [row_spec(tp), row_spec(lp)]
        in_specs += [const_spec(w.shape) for w in weights]

        # VMEM budget: weight residency (1x if single-buffered, else 2x from
        # default double-buffering) + double-buffered activation/output tiles
        # + elementwise/LN intermediates + margin, clamped to the chip's
        # physical VMEM minus headroom for Mosaic's internal scratch.
        w_resident = w_bytes if buffer_weights_once else 2 * w_bytes
        act_bytes = 2 * eff_tile * (tp + lp) * act_isize
        out_bytes = 2 * eff_tile * vp * out_isize
        scratch_bytes = 6 * eff_tile * vp * 4
        want = w_resident + act_bytes + out_bytes + scratch_bytes + (4 << 20)
        cap = _vmem_capacity_bytes() - (8 << 20)
        vmem_limit = int(max(16 << 20, min(want, cap)))

        return pl.pallas_call(
            kernel,
            out_shape=jax.ShapeDtypeStruct((rows_p, vp), out_dtype),
            grid_spec=pltpu.PrefetchScalarGridSpec(
                num_scalar_prefetch=0,
                grid=grid,
                in_specs=in_specs,
                out_specs=pl.BlockSpec((eff_tile, vp), lambda i: (i, 0)),
            ),
            compiler_params=pltpu.CompilerParams(
                dimension_semantics=("parallel",),
                vmem_limit_bytes=vmem_limit),
            cost_estimate=cost,
        )(text_p, layout_p, *weights)

    if _BUFFERED_WEIGHTS_OK:
        try:
            out = run(True)
        except Exception:
            # pipeline_mode=pl.Buffered(1) unsupported on this Pallas build;
            # rebuild with default (double-buffered) constant specs.
            _BUFFERED_WEIGHTS_OK = False
            out = run(False)
    else:
        out = run(False)

    # Strip row / lane padding.
    return out[:n_rows, :visual_dim]
    # TODO(synk): for very large visual_dim on v7x, add an output-feature grid
    # axis that column-tiles wf1t/wf1l/wf2 instead of keeping them resident.


def init_params(key, text_dim, layout_dim, visual_dim):
    ks = jax.random.split(key, 6)
    scale = 0.05

    def w(k, shape):
        return (scale * jax.random.normal(k, shape)).astype(jnp.float32)

    return {
        # text_encoder
        "wt": w(ks[0], (text_dim, visual_dim)),
        "bt": jnp.zeros((1, visual_dim), jnp.float32),
        "gt": jnp.ones((1, visual_dim), jnp.float32),
        "bnt": jnp.zeros((1, visual_dim), jnp.float32),
        # layout_encoder
        "wl": w(ks[1], (layout_dim, visual_dim)),
        "bl": jnp.zeros((1, visual_dim), jnp.float32),
        "gl": jnp.ones((1, visual_dim), jnp.float32),
        "bnl": jnp.zeros((1, visual_dim), jnp.float32),
        # fusion first linear, split into the two halves of the concat input
        "wf1t": w(ks[2], (visual_dim, visual_dim)),
        "wf1l": w(ks[3], (visual_dim, visual_dim)),
        "bf1": jnp.zeros((1, visual_dim), jnp.float32),
        "gf": jnp.ones((1, visual_dim), jnp.float32),
        "bnf": jnp.zeros((1, visual_dim), jnp.float32),
        # fusion second linear
        "wf2": w(ks[4], (visual_dim, visual_dim)),
        "bf2": jnp.zeros((1, visual_dim), jnp.float32),
    }


def reference_forward(text, layout, p):
    def ln(x, g, b):
        mu = jnp.mean(x, -1, keepdims=True)
        var = jnp.mean((x - mu) ** 2, -1, keepdims=True)
        return (x - mu) * jax.lax.rsqrt(var + LN_EPS) * g + b

    tv = jnp.maximum(ln(text @ p["wt"] + p["bt"], p["gt"], p["bnt"]), 0.0)
    lv = jnp.maximum(ln(layout @ p["wl"] + p["bl"], p["gl"], p["bnl"]), 0.0)
    h = jnp.maximum(ln(tv @ p["wf1t"] + lv @ p["wf1l"] + p["bf1"],
                       p["gf"], p["bnf"]), 0.0)
    return h @ p["wf2"] + p["bf2"]


if __name__ == "__main__":
    # bf16 matmul operands + bf16 output -> relaxed tolerance vs f32 reference.
    TOL = 5e-2

    key = jax.random.PRNGKey(0)
    k_text, k_layout, k_params, k_big = jax.random.split(key, 4)

    # --- small test (module-sized shapes) ---
    batch, seq = 2, 8
    text_dim, layout_dim, visual_dim = 32, 16, 64
    n_rows = batch * seq

    text_features = jax.random.normal(k_text, (batch, seq, text_dim), jnp.float32)
    layout_features = jax.random.normal(k_layout, (batch, seq, layout_dim), jnp.float32)
    params = init_params(k_params, text_dim, layout_dim, visual_dim)

    prepared = prepare_params(params)  # padded bf16 weights, built ONCE

    text_2d = text_features.reshape(n_rows, text_dim)
    layout_2d = layout_features.reshape(n_rows, layout_dim)

    out = visual_reconstructor_forward(text_2d, layout_2d, prepared)
    out = out.astype(jnp.float32).reshape(batch, seq, visual_dim)
    jax.block_until_ready(out)

    ref = reference_forward(text_2d, layout_2d, params).reshape(batch, seq, visual_dim)
    err = jnp.max(jnp.abs(out - ref))
    assert jnp.allclose(out, ref, atol=TOL, rtol=TOL), (
        f"small-case mismatch: max abs err {err}")

    # --- larger test: multi-step grid, awkward row count (adaptive tile),
    #     reuses the cached padded weights (no per-call re-pad / re-cast) ---
    big_rows = 500
    kt, kl = jax.random.split(k_big)
    big_text = jax.random.normal(kt, (big_rows, text_dim), jnp.float32)
    big_layout = jax.random.normal(kl, (big_rows, layout_dim), jnp.float32)

    big_out = visual_reconstructor_forward(big_text, big_layout, prepared)
    jax.block_until_ready(big_out)
    big_out_f32 = big_out.astype(jnp.float32)
    big_ref = reference_forward(big_text, big_layout, params)
    big_err = jnp.max(jnp.abs(big_out_f32 - big_ref))
    assert jnp.allclose(big_out_f32, big_ref, atol=TOL, rtol=TOL), (
        f"big-case mismatch: max abs err {big_err}")

    print("KERNEL_OK")
</pallas_src>

<mosaic_0001>
module attributes {stable_mosaic.version = 11 : i64} {
  func.func @_visual_reconstructor_kernel(%arg0: i32, %arg1: memref<16x128xf32, #tpu.memory_space<vmem>>, %arg2: memref<16x128xf32, #tpu.memory_space<vmem>>, %arg3: memref<128x128xbf16, #tpu.memory_space<vmem>>, %arg4: memref<1x128xf32, #tpu.memory_space<vmem>>, %arg5: memref<1x128xf32, #tpu.memory_space<vmem>>, %arg6: memref<1x128xf32, #tpu.memory_space<vmem>>, %arg7: memref<128x128xbf16, #tpu.memory_space<vmem>>, %arg8: memref<1x128xf32, #tpu.memory_space<vmem>>, %arg9: memref<1x128xf32, #tpu.memory_space<vmem>>, %arg10: memref<1x128xf32, #tpu.memory_space<vmem>>, %arg11: memref<128x128xbf16, #tpu.memory_space<vmem>>, %arg12: memref<128x128xbf16, #tpu.memory_space<vmem>>, %arg13: memref<1x128xf32, #tpu.memory_space<vmem>>, %arg14: memref<1x128xf32, #tpu.memory_space<vmem>>, %arg15: memref<1x128xf32, #tpu.memory_space<vmem>>, %arg16: memref<128x128xbf16, #tpu.memory_space<vmem>>, %arg17: memref<1x128xf32, #tpu.memory_space<vmem>>, %arg18: memref<16x128xbf16, #tpu.memory_space<vmem>>) attributes {dimension_semantics = [#tpu.dimension_semantics<parallel>], iteration_bounds = array<i64: 1>, scalar_prefetch = 0 : i64, scratch_operands = 0 : i64, tpu.core_type = #tpu.core_type<tc>, window_params = [{transform_indices = @transform_0, window_bounds = array<i64: 16, 128>}, {transform_indices = @transform_1, window_bounds = array<i64: 16, 128>}, {pipeline_mode = #tpu.pipeline_mode<synchronous>, transform_indices = @transform_2, window_bounds = array<i64: 128, 128>}, {pipeline_mode = #tpu.pipeline_mode<synchronous>, transform_indices = @transform_3, window_bounds = array<i64: 1, 128>}, {pipeline_mode = #tpu.pipeline_mode<synchronous>, transform_indices = @transform_4, window_bounds = array<i64: 1, 128>}, {pipeline_mode = #tpu.pipeline_mode<synchronous>, transform_indices = @transform_5, window_bounds = array<i64: 1, 128>}, {pipeline_mode = #tpu.pipeline_mode<synchronous>, transform_indices = @transform_6, window_bounds = array<i64: 128, 128>}, {pipeline_mode = #tpu.pipeline_mode<synchronous>, transform_indices = @transform_7, window_bounds = array<i64: 1, 128>}, {pipeline_mode = #tpu.pipeline_mode<synchronous>, transform_indices = @transform_8, window_bounds = array<i64: 1, 128>}, {pipeline_mode = #tpu.pipeline_mode<synchronous>, transform_indices = @transform_9, window_bounds = array<i64: 1, 128>}, {pipeline_mode = #tpu.pipeline_mode<synchronous>, transform_indices = @transform_10, window_bounds = array<i64: 128, 128>}, {pipeline_mode = #tpu.pipeline_mode<synchronous>, transform_indices = @transform_11, window_bounds = array<i64: 128, 128>}, {pipeline_mode = #tpu.pipeline_mode<synchronous>, transform_indices = @transform_12, window_bounds = array<i64: 1, 128>}, {pipeline_mode = #tpu.pipeline_mode<synchronous>, transform_indices = @transform_13, window_bounds = array<i64: 1, 128>}, {pipeline_mode = #tpu.pipeline_mode<synchronous>, transform_indices = @transform_14, window_bounds = array<i64: 1, 128>}, {pipeline_mode = #tpu.pipeline_mode<synchronous>, transform_indices = @transform_15, window_bounds = array<i64: 128, 128>}, {pipeline_mode = #tpu.pipeline_mode<synchronous>, transform_indices = @transform_16, window_bounds = array<i64: 1, 128>}, {transform_indices = @transform_17, window_bounds = array<i64: 16, 128>}]} {
    %c0 = arith.constant 0 : index
    %c0_0 = arith.constant 0 : index
    %0 = vector.load %arg1[%c0, %c0_0] : memref<16x128xf32, #tpu.memory_space<vmem>>, vector<16x128xf32>
    %1 = arith.truncf %0 : vector<16x128xf32> to vector<16x128xbf16>
    %c0_1 = arith.constant 0 : index
    %c0_2 = arith.constant 0 : index
    %2 = vector.load %arg2[%c0_1, %c0_2] : memref<16x128xf32, #tpu.memory_space<vmem>>, vector<16x128xf32>
    %3 = arith.truncf %2 : vector<16x128xf32> to vector<16x128xbf16>
    %c0_3 = arith.constant 0 : index
    %c0_4 = arith.constant 0 : index
    %4 = vector.load %arg3[%c0_3, %c0_4] : memref<128x128xbf16, #tpu.memory_space<vmem>>, vector<128x128xbf16>
    %cst = arith.constant dense<0.000000e+00> : vector<16x128xf32>
    %5 = tpu.matmul %1, %4, %cst {dimension_numbers = #tpu.dot_dimension_numbers<[1], [0], [0], [1], [0, 0, 1, 1], [], []>} : vector<16x128xbf16>, vector<128x128xbf16>, vector<16x128xf32> -> vector<16x128xf32>
    %c0_5 = arith.constant 0 : index
    %c0_6 = arith.constant 0 : index
    %6 = vector.load %arg4[%c0_5, %c0_6] : memref<1x128xf32, #tpu.memory_space<vmem>>, vector<1x128xf32>
    %7 = vector.broadcast %6 : vector<1x128xf32> to vector<16x128xf32>
    %8 = arith.addf %5, %7 : vector<16x128xf32>
    %c0_7 = arith.constant 0 : index
    %c0_8 = arith.constant 0 : index
    %9 = vector.load %arg5[%c0_7, %c0_8] : memref<1x128xf32, #tpu.memory_space<vmem>>, vector<1x128xf32>
    %c0_9 = arith.constant 0 : index
    %c0_10 = arith.constant 0 : index
    %10 = vector.load %arg6[%c0_9, %c0_10] : memref<1x128xf32, #tpu.memory_space<vmem>>, vector<1x128xf32>
    %cst_11 = arith.constant dense<0.000000e+00> : vector<16xf32>
    %11 = vector.multi_reduction <add>, %8, %cst_11 [1] : vector<16x128xf32> to vector<16xf32>
    %12 = vector.shape_cast %11 : vector<16xf32> to vector<16x1xf32>
    %13 = arith.mulf %8, %8 : vector<16x128xf32>
    %cst_12 = arith.constant dense<0.000000e+00> : vector<16xf32>
    %14 = vector.multi_reduction <add>, %13, %cst_12 [1] : vector<16x128xf32> to vector<16xf32>
    %15 = vector.shape_cast %14 : vector<16xf32> to vector<16x1xf32>
    %cst_13 = arith.constant 1.562500e-02 : f32
    %16 = vector.broadcast %cst_13 : f32 to vector<16x1xf32>
    %17 = arith.mulf %12, %16 : vector<16x1xf32>
    %cst_14 = arith.constant 1.562500e-02 : f32
    %18 = vector.broadcast %cst_14 : f32 to vector<16x1xf32>
    %19 = arith.mulf %15, %18 : vector<16x1xf32>
    %20 = arith.mulf %17, %17 : vector<16x1xf32>
    %21 = arith.subf %19, %20 : vector<16x1xf32>
    %cst_15 = arith.constant 0.000000e+00 : f32
    %22 = vector.broadcast %cst_15 : f32 to vector<16x1xf32>
    %23 = arith.maximumf %21, %22 : vector<16x1xf32>
    %24 = vector.broadcast %17 : vector<16x1xf32> to vector<16x128xf32>
    %25 = arith.subf %8, %24 : vector<16x128xf32>
    %cst_16 = arith.constant 9.99999974E-6 : f32
    %26 = vector.broadcast %cst_16 : f32 to vector<16x1xf32>
    %27 = arith.addf %23, %26 : vector<16x1xf32>
    %28 = math.rsqrt %27 : vector<16x1xf32>
    %29 = vector.broadcast %28 : vector<16x1xf32> to vector<16x128xf32>
    %30 = arith.mulf %25, %29 : vector<16x128xf32>
    %31 = vector.broadcast %9 : vector<1x128xf32> to vector<16x128xf32>
    %32 = arith.mulf %30, %31 : vector<16x128xf32>
    %33 = vector.broadcast %10 : vector<1x128xf32> to vector<16x128xf32>
    %34 = arith.addf %32, %33 : vector<16x128xf32>
    %cst_17 = arith.constant 0.000000e+00 : f32
    %35 = vector.broadcast %cst_17 : f32 to vector<16x128xf32>
    %36 = arith.maximumf %34, %35 : vector<16x128xf32>
    %37 = arith.truncf %36 : vector<16x128xf32> to vector<16x128xbf16>
    %c0_18 = arith.constant 0 : index
    %c0_19 = arith.constant 0 : index
    %38 = vector.load %arg7[%c0_18, %c0_19] : memref<128x128xbf16, #tpu.memory_space<vmem>>, vector<128x128xbf16>
    %cst_20 = arith.constant dense<0.000000e+00> : vector<16x128xf32>
    %39 = tpu.matmul %3, %38, %cst_20 {dimension_numbers = #tpu.dot_dimension_numbers<[1], [0], [0], [1], [0, 0, 1, 1], [], []>} : vector<16x128xbf16>, vector<128x128xbf16>, vector<16x128xf32> -> vector<16x128xf32>
    %c0_21 = arith.constant 0 : index
    %c0_22 = arith.constant 0 : index
    %40 = vector.load %arg8[%c0_21, %c0_22] : memref<1x128xf32, #tpu.memory_space<vmem>>, vector<1x128xf32>
    %41 = vector.broadcast %40 : vector<1x128xf32> to vector<16x128xf32>
    %42 = arith.addf %39, %41 : vector<16x128xf32>
    %c0_23 = arith.constant 0 : index
    %c0_24 = arith.constant 0 : index
    %43 = vector.load %arg9[%c0_23, %c0_24] : memref<1x128xf32, #tpu.memory_space<vmem>>, vector<1x128xf32>
    %c0_25 = arith.constant 0 : index
    %c0_26 = arith.constant 0 : index
    %44 = vector.load %arg10[%c0_25, %c0_26] : memref<1x128xf32, #tpu.memory_space<vmem>>, vector<1x128xf32>
    %cst_27 = arith.constant dense<0.000000e+00> : vector<16xf32>
    %45 = vector.multi_reduction <add>, %42, %cst_27 [1] : vector<16x128xf32> to vector<16xf32>
    %46 = vector.shape_cast %45 : vector<16xf32> to vector<16x1xf32>
    %47 = arith.mulf %42, %42 : vector<16x128xf32>
    %cst_28 = arith.constant dense<0.000000e+00> : vector<16xf32>
    %48 = vector.multi_reduction <add>, %47, %cst_28 [1] : vector<16x128xf32> to vector<16xf32>
    %49 = vector.shape_cast %48 : vector<16xf32> to vector<16x1xf32>
    %cst_29 = arith.constant 1.562500e-02 : f32
    %50 = vector.broadcast %cst_29 : f32 to vector<16x1xf32>
    %51 = arith.mulf %46, %50 : vector<16x1xf32>
    %cst_30 = arith.constant 1.562500e-02 : f32
    %52 = vector.broadcast %cst_30 : f32 to vector<16x1xf32>
    %53 = arith.mulf %49, %52 : vector<16x1xf32>
    %54 = arith.mulf %51, %51 : vector<16x1xf32>
    %55 = arith.subf %53, %54 : vector<16x1xf32>
    %cst_31 = arith.constant 0.000000e+00 : f32
    %56 = vector.broadcast %cst_31 : f32 to vector<16x1xf32>
    %57 = arith.maximumf %55, %56 : vector<16x1xf32>
    %58 = vector.broadcast %51 : vector<16x1xf32> to vector<16x128xf32>
    %59 = arith.subf %42, %58 : vector<16x128xf32>
    %cst_32 = arith.constant 9.99999974E-6 : f32
    %60 = vector.broadcast %cst_32 : f32 to vector<16x1xf32>
    %61 = arith.addf %57, %60 : vector<16x1xf32>
    %62 = math.rsqrt %61 : vector<16x1xf32>
    %63 = vector.broadcast %62 : vector<16x1xf32> to vector<16x128xf32>
    %64 = arith.mulf %59, %63 : vector<16x128xf32>
    %65 = vector.broadcast %43 : vector<1x128xf32> to vector<16x128xf32>
    %66 = arith.mulf %64, %65 : vector<16x128xf32>
    %67 = vector.broadcast %44 : vector<1x128xf32> to vector<16x128xf32>
    %68 = arith.addf %66, %67 : vector<16x128xf32>
    %cst_33 = arith.constant 0.000000e+00 : f32
    %69 = vector.broadcast %cst_33 : f32 to vector<16x128xf32>
    %70 = arith.maximumf %68, %69 : vector<16x128xf32>
    %71 = arith.truncf %70 : vector<16x128xf32> to vector<16x128xbf16>
    %c0_34 = arith.constant 0 : index
    %c0_35 = arith.constant 0 : index
    %72 = vector.load %arg11[%c0_34, %c0_35] : memref<128x128xbf16, #tpu.memory_space<vmem>>, vector<128x128xbf16>
    %cst_36 = arith.constant dense<0.000000e+00> : vector<16x128xf32>
    %73 = tpu.matmul %37, %72, %cst_36 {dimension_numbers = #tpu.dot_dimension_numbers<[1], [0], [0], [1], [0, 0, 1, 1], [], []>} : vector<16x128xbf16>, vector<128x128xbf16>, vector<16x128xf32> -> vector<16x128xf32>
    %c0_37 = arith.constant 0 : index
    %c0_38 = arith.constant 0 : index
    %74 = vector.load %arg12[%c0_37, %c0_38] : memref<128x128xbf16, #tpu.memory_space<vmem>>, vector<128x128xbf16>
    %cst_39 = arith.constant dense<0.000000e+00> : vector<16x128xf32>
    %75 = tpu.matmul %71, %74, %cst_39 {dimension_numbers = #tpu.dot_dimension_numbers<[1], [0], [0], [1], [0, 0, 1, 1], [], []>} : vector<16x128xbf16>, vector<128x128xbf16>, vector<16x128xf32> -> vector<16x128xf32>
    %76 = arith.addf %73, %75 : vector<16x128xf32>
    %c0_40 = arith.constant 0 : index
    %c0_41 = arith.constant 0 : index
    %77 = vector.load %arg13[%c0_40, %c0_41] : memref<1x128xf32, #tpu.memory_space<vmem>>, vector<1x128xf32>
    %78 = vector.broadcast %77 : vector<1x128xf32> to vector<16x128xf32>
    %79 = arith.addf %76, %78 : vector<16x128xf32>
    %c0_42 = arith.constant 0 : index
    %c0_43 = arith.constant 0 : index
    %80 = vector.load %arg14[%c0_42, %c0_43] : memref<1x128xf32, #tpu.memory_space<vmem>>, vector<1x128xf32>
    %c0_44 = arith.constant 0 : index
    %c0_45 = arith.constant 0 : index
    %81 = vector.load %arg15[%c0_44, %c0_45] : memref<1x128xf32, #tpu.memory_space<vmem>>, vector<1x128xf32>
    %cst_46 = arith.constant dense<0.000000e+00> : vector<16xf32>
    %82 = vector.multi_reduction <add>, %79, %cst_46 [1] : vector<16x128xf32> to vector<16xf32>
    %83 = vector.shape_cast %82 : vector<16xf32> to vector<16x1xf32>
    %84 = arith.mulf %79, %79 : vector<16x128xf32>
    %cst_47 = arith.constant dense<0.000000e+00> : vector<16xf32>
    %85 = vector.multi_reduction <add>, %84, %cst_47 [1] : vector<16x128xf32> to vector<16xf32>
    %86 = vector.shape_cast %85 : vector<16xf32> to vector<16x1xf32>
    %cst_48 = arith.constant 1.562500e-02 : f32
    %87 = vector.broadcast %cst_48 : f32 to vector<16x1xf32>
    %88 = arith.mulf %83, %87 : vector<16x1xf32>
    %cst_49 = arith.constant 1.562500e-02 : f32
    %89 = vector.broadcast %cst_49 : f32 to vector<16x1xf32>
    %90 = arith.mulf %86, %89 : vector<16x1xf32>
    %91 = arith.mulf %88, %88 : vector<16x1xf32>
    %92 = arith.subf %90, %91 : vector<16x1xf32>
    %cst_50 = arith.constant 0.000000e+00 : f32
    %93 = vector.broadcast %cst_50 : f32 to vector<16x1xf32>
    %94 = arith.maximumf %92, %93 : vector<16x1xf32>
    %95 = vector.broadcast %88 : vector<16x1xf32> to vector<16x128xf32>
    %96 = arith.subf %79, %95 : vector<16x128xf32>
    %cst_51 = arith.constant 9.99999974E-6 : f32
    %97 = vector.broadcast %cst_51 : f32 to vector<16x1xf32>
    %98 = arith.addf %94, %97 : vector<16x1xf32>
    %99 = math.rsqrt %98 : vector<16x1xf32>
    %100 = vector.broadcast %99 : vector<16x1xf32> to vector<16x128xf32>
    %101 = arith.mulf %96, %100 : vector<16x128xf32>
    %102 = vector.broadcast %80 : vector<1x128xf32> to vector<16x128xf32>
    %103 = arith.mulf %101, %102 : vector<16x128xf32>
    %104 = vector.broadcast %81 : vector<1x128xf32> to vector<16x128xf32>
    %105 = arith.addf %103, %104 : vector<16x128xf32>
    %cst_52 = arith.constant 0.000000e+00 : f32
    %106 = vector.broadcast %cst_52 : f32 to vector<16x128xf32>
    %107 = arith.maximumf %105, %106 : vector<16x128xf32>
    %108 = arith.truncf %107 : vector<16x128xf32> to vector<16x128xbf16>
    %c0_53 = arith.constant 0 : index
    %c0_54 = arith.constant 0 : index
    %109 = vector.load %arg16[%c0_53, %c0_54] : memref<128x128xbf16, #tpu.memory_space<vmem>>, vector<128x128xbf16>
    %cst_55 = arith.constant dense<0.000000e+00> : vector<16x128xf32>
    %110 = tpu.matmul %108, %109, %cst_55 {dimension_numbers = #tpu.dot_dimension_numbers<[1], [0], [0], [1], [0, 0, 1, 1], [], []>} : vector<16x128xbf16>, vector<128x128xbf16>, vector<16x128xf32> -> vector<16x128xf32>
    %c0_56 = arith.constant 0 : index
    %c0_57 = arith.constant 0 : index
    %111 = vector.load %arg17[%c0_56, %c0_57] : memref<1x128xf32, #tpu.memory_space<vmem>>, vector<1x128xf32>
    %112 = vector.broadcast %111 : vector<1x128xf32> to vector<16x128xf32>
    %113 = arith.addf %110, %112 : vector<16x128xf32>
    %114 = arith.truncf %113 : vector<16x128xf32> to vector<16x128xbf16>
    %c0_58 = arith.constant 0 : index
    %c0_59 = arith.constant 0 : index
    %115 = vector.load %arg18[%c0_58, %c0_59] : memref<16x128xbf16, #tpu.memory_space<vmem>>, vector<16x128xbf16>
    tpu.vector_store %arg18[%c0_58, %c0_59], %114 {strides = array<i32>} : memref<16x128xbf16, #tpu.memory_space<vmem>>, vector<16x128xbf16>,
    return
  }
  func.func @transform_0(%arg0: i32) -> (i32, i32) {
    %c0_i32 = arith.constant 0 : i32
    %c0_i32_0 = arith.constant 0 : i32
    return %arg0, %c0_i32 : i32, i32
  }
  func.func @transform_1(%arg0: i32) -> (i32, i32) {
    %c0_i32 = arith.constant 0 : i32
    %c0_i32_0 = arith.constant 0 : i32
    return %arg0, %c0_i32 : i32, i32
  }
  func.func @transform_2(%arg0: i32) -> (i32, i32) {
    %c0_i32 = arith.constant 0 : i32
    %c0_i32_0 = arith.constant 0 : i32
    %c0_i32_1 = arith.constant 0 : i32
    return %c0_i32, %c0_i32_0 : i32, i32
  }
  func.func @transform_3(%arg0: i32) -> (i32, i32) {
    %c0_i32 = arith.constant 0 : i32
    %c0_i32_0 = arith.constant 0 : i32
    %c0_i32_1 = arith.constant 0 : i32
    return %c0_i32, %c0_i32_0 : i32, i32
  }
  func.func @transform_4(%arg0: i32) -> (i32, i32) {
    %c0_i32 = arith.constant 0 : i32
    %c0_i32_0 = arith.constant 0 : i32
    %c0_i32_1 = arith.constant 0 : i32
    return %c0_i32, %c0_i32_0 : i32, i32
  }
  func.func @transform_5(%arg0: i32) -> (i32, i32) {
    %c0_i32 = arith.constant 0 : i32
    %c0_i32_0 = arith.constant 0 : i32
    %c0_i32_1 = arith.constant 0 : i32
    return %c0_i32, %c0_i32_0 : i32, i32
  }
  func.func @transform_6(%arg0: i32) -> (i32, i32) {
    %c0_i32 = arith.constant 0 : i32
    %c0_i32_0 = arith.constant 0 : i32
    %c0_i32_1 = arith.constant 0 : i32
    return %c0_i32, %c0_i32_0 : i32, i32
  }
  func.func @transform_7(%arg0: i32) -> (i32, i32) {
    %c0_i32 = arith.constant 0 : i32
    %c0_i32_0 = arith.constant 0 : i32
    %c0_i32_1 = arith.constant 0 : i32
    return %c0_i32, %c0_i32_0 : i32, i32
  }
  func.func @transform_8(%arg0: i32) -> (i32, i32) {
    %c0_i32 = arith.constant 0 : i32
    %c0_i32_0 = arith.constant 0 : i32
    %c0_i32_1 = arith.constant 0 : i32
    return %c0_i32, %c0_i32_0 : i32, i32
  }
  func.func @transform_9(%arg0: i32) -> (i32, i32) {
    %c0_i32 = arith.constant 0 : i32
    %c0_i32_0 = arith.constant 0 : i32
    %c0_i32_1 = arith.constant 0 : i32
    return %c0_i32, %c0_i32_0 : i32, i32
  }
  func.func @transform_10(%arg0: i32) -> (i32, i32) {
    %c0_i32 = arith.constant 0 : i32
    %c0_i32_0 = arith.constant 0 : i32
    %c0_i32_1 = arith.constant 0 : i32
    return %c0_i32, %c0_i32_0 : i32, i32
  }
  func.func @transform_11(%arg0: i32) -> (i32, i32) {
    %c0_i32 = arith.constant 0 : i32
    %c0_i32_0 = arith.constant 0 : i32
    %c0_i32_1 = arith.constant 0 : i32
    return %c0_i32, %c0_i32_0 : i32, i32
  }
  func.func @transform_12(%arg0: i32) -> (i32, i32) {
    %c0_i32 = arith.constant 0 : i32
    %c0_i32_0 = arith.constant 0 : i32
    %c0_i32_1 = arith.constant 0 : i32
    return %c0_i32, %c0_i32_0 : i32, i32
  }
  func.func @transform_13(%arg0: i32) -> (i32, i32) {
    %c0_i32 = arith.constant 0 : i32
    %c0_i32_0 = arith.constant 0 : i32
    %c0_i32_1 = arith.constant 0 : i32
    return %c0_i32, %c0_i32_0 : i32, i32
  }
  func.func @transform_14(%arg0: i32) -> (i32, i32) {
    %c0_i32 = arith.constant 0 : i32
    %c0_i32_0 = arith.constant 0 : i32
    %c0_i32_1 = arith.constant 0 : i32
    return %c0_i32, %c0_i32_0 : i32, i32
  }
  func.func @transform_15(%arg0: i32) -> (i32, i32) {
    %c0_i32 = arith.constant 0 : i32
    %c0_i32_0 = arith.constant 0 : i32
    %c0_i32_1 = arith.constant 0 : i32
    return %c0_i32, %c0_i32_0 : i32, i32
  }
  func.func @transform_16(%arg0: i32) -> (i32, i32) {
    %c0_i32 = arith.constant 0 : i32
    %c0_i32_0 = arith.constant 0 : i32
    %c0_i32_1 = arith.constant 0 : i32
    return %c0_i32, %c0_i32_0 : i32, i32
  }
  func.func @transform_17(%arg0: i32) -> (i32, i32) {
    %c0_i32 = arith.constant 0 : i32
    %c0_i32_0 = arith.constant 0 : i32
    return %arg0, %c0_i32 : i32, i32
  }
}

module attributes {stable_mosaic.version = 11 : i64} {
  func.func @_visual_reconstructor_kernel(%arg0: i32, %arg1: memref<16x128xf32, #tpu.memory_space<vmem>>, %arg2: memref<16x128xf32, #tpu.memory_space<vmem>>, %arg3: memref<128x128xbf16, #tpu.memory_space<vmem>>, %arg4: memref<1x128xf32, #tpu.memory_space<vmem>>, %arg5: memref<1x128xf32, #tpu.memory_space<vmem>>, %arg6: memref<1x128xf32, #tpu.memory_space<vmem>>, %arg7: memref<128x128xbf16, #tpu.memory_space<vmem>>, %arg8: memref<1x128xf32, #tpu.memory_space<vmem>>, %arg9: memref<1x128xf32, #tpu.memory_space<vmem>>, %arg10: memref<1x128xf32, #tpu.memory_space<vmem>>, %arg11: memref<128x128xbf16, #tpu.memory_space<vmem>>, %arg12: memref<128x128xbf16, #tpu.memory_space<vmem>>, %arg13: memref<1x128xf32, #tpu.memory_space<vmem>>, %arg14: memref<1x128xf32, #tpu.memory_space<vmem>>, %arg15: memref<1x128xf32, #tpu.memory_space<vmem>>, %arg16: memref<128x128xbf16, #tpu.memory_space<vmem>>, %arg17: memref<1x128xf32, #tpu.memory_space<vmem>>, %arg18: memref<16x128xbf16, #tpu.memory_space<vmem>>) attributes {dimension_semantics = [#tpu.dimension_semantics<parallel>], iteration_bounds = array<i64: 1>, scalar_prefetch = 0 : i64, scratch_operands = 0 : i64, tpu.core_type = #tpu.core_type<tc>, window_params = [{transform_indices = @transform_0, window_bounds = array<i64: 16, 128>}, {transform_indices = @transform_1, window_bounds = array<i64: 16, 128>}, {pipeline_mode = #tpu.pipeline_mode<synchronous>, transform_indices = @transform_2, window_bounds = array<i64: 128, 128>}, {pipeline_mode = #tpu.pipeline_mode<synchronous>, transform_indices = @transform_3, window_bounds = array<i64: 1, 128>}, {pipeline_mode = #tpu.pipeline_mode<synchronous>, transform_indices = @transform_4, window_bounds = array<i64: 1, 128>}, {pipeline_mode = #tpu.pipeline_mode<synchronous>, transform_indices = @transform_5, window_bounds = array<i64: 1, 128>}, {pipeline_mode = #tpu.pipeline_mode<synchronous>, transform_indices = @transform_6, window_bounds = array<i64: 128, 128>}, {pipeline_mode = #tpu.pipeline_mode<synchronous>, transform_indices = @transform_7, window_bounds = array<i64: 1, 128>}, {pipeline_mode = #tpu.pipeline_mode<synchronous>, transform_indices = @transform_8, window_bounds = array<i64: 1, 128>}, {pipeline_mode = #tpu.pipeline_mode<synchronous>, transform_indices = @transform_9, window_bounds = array<i64: 1, 128>}, {pipeline_mode = #tpu.pipeline_mode<synchronous>, transform_indices = @transform_10, window_bounds = array<i64: 128, 128>}, {pipeline_mode = #tpu.pipeline_mode<synchronous>, transform_indices = @transform_11, window_bounds = array<i64: 128, 128>}, {pipeline_mode = #tpu.pipeline_mode<synchronous>, transform_indices = @transform_12, window_bounds = array<i64: 1, 128>}, {pipeline_mode = #tpu.pipeline_mode<synchronous>, transform_indices = @transform_13, window_bounds = array<i64: 1, 128>}, {pipeline_mode = #tpu.pipeline_mode<synchronous>, transform_indices = @transform_14, window_bounds = array<i64: 1, 128>}, {pipeline_mode = #tpu.pipeline_mode<synchronous>, transform_indices = @transform_15, window_bounds = array<i64: 128, 128>}, {pipeline_mode = #tpu.pipeline_mode<synchronous>, transform_indices = @transform_16, window_bounds = array<i64: 1, 128>}, {transform_indices = @transform_17, window_bounds = array<i64: 16, 128>}]} {
    %c0 = arith.constant 0 : index
    %c0_0 = arith.constant 0 : index
    %0 = vector.load %arg1[%c0, %c0_0] : memref<16x128xf32, #tpu.memory_space<vmem>>, vector<16x128xf32>
    %1 = arith.truncf %0 : vector<16x128xf32> to vector<16x128xbf16>
    %c0_1 = arith.constant 0 : index
    %c0_2 = arith.constant 0 : index
    %2 = vector.load %arg2[%c0_1, %c0_2] : memref<16x128xf32, #tpu.memory_space<vmem>>, vector<16x128xf32>
    %3 = arith.truncf %2 : vector<16x128xf32> to vector<16x128xbf16>
    %c0_3 = arith.constant 0 : index
    %c0_4 = arith.constant 0 : index
    %4 = vector.load %arg3[%c0_3, %c0_4] : memref<128x128xbf16, #tpu.memory_space<vmem>>, vector<128x128xbf16>
    %cst = arith.constant dense<0.000000e+00> : vector<16x128xf32>
    %5 = tpu.matmul %1, %4, %cst {dimension_numbers = #tpu.dot_dimension_numbers<[1], [0], [0], [1], [0, 0, 1, 1], [], []>} : vector<16x128xbf16>, vector<128x128xbf16>, vector<16x128xf32> -> vector<16x128xf32>
    %c0_5 = arith.constant 0 : index
    %c0_6 = arith.constant 0 : index
    %6 = vector.load %arg4[%c0_5, %c0_6] : memref<1x128xf32, #tpu.memory_space<vmem>>, vector<1x128xf32>
    %7 = vector.broadcast %6 : vector<1x128xf32> to vector<16x128xf32>
    %8 = arith.addf %5, %7 : vector<16x128xf32>
    %c0_7 = arith.constant 0 : index
    %c0_8 = arith.constant 0 : index
    %9 = vector.load %arg5[%c0_7, %c0_8] : memref<1x128xf32, #tpu.memory_space<vmem>>, vector<1x128xf32>
    %c0_9 = arith.constant 0 : index
    %c0_10 = arith.constant 0 : index
    %10 = vector.load %arg6[%c0_9, %c0_10] : memref<1x128xf32, #tpu.memory_space<vmem>>, vector<1x128xf32>
    %cst_11 = arith.constant dense<0.000000e+00> : vector<16xf32>
    %11 = vector.multi_reduction <add>, %8, %cst_11 [1] : vector<16x128xf32> to vector<16xf32>
    %12 = vector.shape_cast %11 : vector<16xf32> to vector<16x1xf32>
    %13 = arith.mulf %8, %8 : vector<16x128xf32>
    %cst_12 = arith.constant dense<0.000000e+00> : vector<16xf32>
    %14 = vector.multi_reduction <add>, %13, %cst_12 [1] : vector<16x128xf32> to vector<16xf32>
    %15 = vector.shape_cast %14 : vector<16xf32> to vector<16x1xf32>
    %cst_13 = arith.constant 1.562500e-02 : f32
    %16 = vector.broadcast %cst_13 : f32 to vector<16x1xf32>
    %17 = arith.mulf %12, %16 : vector<16x1xf32>
    %cst_14 = arith.constant 1.562500e-02 : f32
    %18 = vector.broadcast %cst_14 : f32 to vector<16x1xf32>
    %19 = arith.mulf %15, %18 : vector<16x1xf32>
    %20 = arith.mulf %17, %17 : vector<16x1xf32>
    %21 = arith.subf %19, %20 : vector<16x1xf32>
    %cst_15 = arith.constant 0.000000e+00 : f32
    %22 = vector.broadcast %cst_15 : f32 to vector<16x1xf32>
    %23 = arith.maximumf %21, %22 : vector<16x1xf32>
    %24 = vector.broadcast %17 : vector<16x1xf32> to vector<16x128xf32>
    %25 = arith.subf %8, %24 : vector<16x128xf32>
    %cst_16 = arith.constant 9.99999974E-6 : f32
    %26 = vector.broadcast %cst_16 : f32 to vector<16x1xf32>
    %27 = arith.addf %23, %26 : vector<16x1xf32>
    %28 = math.rsqrt %27 : vector<16x1xf32>
    %29 = vector.broadcast %28 : vector<16x1xf32> to vector<16x128xf32>
    %30 = arith.mulf %25, %29 : vector<16x128xf32>
    %31 = vector.broadcast %9 : vector<1x128xf32> to vector<16x128xf32>
    %32 = arith.mulf %30, %31 : vector<16x128xf32>
    %33 = vector.broadcast %10 : vector<1x128xf32> to vector<16x128xf32>
    %34 = arith.addf %32, %33 : vector<16x128xf32>
    %cst_17 = arith.constant 0.000000e+00 : f32
    %35 = vector.broadcast %cst_17 : f32 to vector<16x128xf32>
    %36 = arith.maximumf %34, %35 : vector<16x128xf32>
    %37 = arith.truncf %36 : vector<16x128xf32> to vector<16x128xbf16>
    %c0_18 = arith.constant 0 : index
    %c0_19 = arith.constant 0 : index
    %38 = vector.load %arg7[%c0_18, %c0_19] : memref<128x128xbf16, #tpu.memory_space<vmem>>, vector<128x128xbf16>
    %cst_20 = arith.constant dense<0.000000e+00> : vector<16x128xf32>
    %39 = tpu.matmul %3, %38, %cst_20 {dimension_numbers = #tpu.dot_dimension_numbers<[1], [0], [0], [1], [0, 0, 1, 1], [], []>} : vector<16x128xbf16>, vector<128x128xbf16>, vector<16x128xf32> -> vector<16x128xf32>
    %c0_21 = arith.constant 0 : index
    %c0_22 = arith.constant 0 : index
    %40 = vector.load %arg8[%c0_21, %c0_22] : memref<1x128xf32, #tpu.memory_space<vmem>>, vector<1x128xf32>
    %41 = vector.broadcast %40 : vector<1x128xf32> to vector<16x128xf32>
    %42 = arith.addf %39, %41 : vector<16x128xf32>
    %c0_23 = arith.constant 0 : index
    %c0_24 = arith.constant 0 : index
    %43 = vector.load %arg9[%c0_23, %c0_24] : memref<1x128xf32, #tpu.memory_space<vmem>>, vector<1x128xf32>
    %c0_25 = arith.constant 0 : index
    %c0_26 = arith.constant 0 : index
    %44 = vector.load %arg10[%c0_25, %c0_26] : memref<1x128xf32, #tpu.memory_space<vmem>>, vector<1x128xf32>
    %cst_27 = arith.constant dense<0.000000e+00> : vector<16xf32>
    %45 = vector.multi_reduction <add>, %42, %cst_27 [1] : vector<16x128xf32> to vector<16xf32>
    %46 = vector.shape_cast %45 : vector<16xf32> to vector<16x1xf32>
    %47 = arith.mulf %42, %42 : vector<16x128xf32>
    %cst_28 = arith.constant dense<0.000000e+00> : vector<16xf32>
    %48 = vector.multi_reduction <add>, %47, %cst_28 [1] : vector<16x128xf32> to vector<16xf32>
    %49 = vector.shape_cast %48 : vector<16xf32> to vector<16x1xf32>
    %cst_29 = arith.constant 1.562500e-02 : f32
    %50 = vector.broadcast %cst_29 : f32 to vector<16x1xf32>
    %51 = arith.mulf %46, %50 : vector<16x1xf32>
    %cst_30 = arith.constant 1.562500e-02 : f32
    %52 = vector.broadcast %cst_30 : f32 to vector<16x1xf32>
    %53 = arith.mulf %49, %52 : vector<16x1xf32>
    %54 = arith.mulf %51, %51 : vector<16x1xf32>
    %55 = arith.subf %53, %54 : vector<16x1xf32>
    %cst_31 = arith.constant 0.000000e+00 : f32
    %56 = vector.broadcast %cst_31 : f32 to vector<16x1xf32>
    %57 = arith.maximumf %55, %56 : vector<16x1xf32>
    %58 = vector.broadcast %51 : vector<16x1xf32> to vector<16x128xf32>
    %59 = arith.subf %42, %58 : vector<16x128xf32>
    %cst_32 = arith.constant 9.99999974E-6 : f32
    %60 = vector.broadcast %cst_32 : f32 to vector<16x1xf32>
    %61 = arith.addf %57, %60 : vector<16x1xf32>
    %62 = math.rsqrt %61 : vector<16x1xf32>
    %63 = vector.broadcast %62 : vector<16x1xf32> to vector<16x128xf32>
    %64 = arith.mulf %59, %63 : vector<16x128xf32>
    %65 = vector.broadcast %43 : vector<1x128xf32> to vector<16x128xf32>
    %66 = arith.mulf %64, %65 : vector<16x128xf32>
    %67 = vector.broadcast %44 : vector<1x128xf32> to vector<16x128xf32>
    %68 = arith.addf %66, %67 : vector<16x128xf32>
    %cst_33 = arith.constant 0.000000e+00 : f32
    %69 = vector.broadcast %cst_33 : f32 to vector<16x128xf32>
    %70 = arith.maximumf %68, %69 : vector<16x128xf32>
    %71 = arith.truncf %70 : vector<16x128xf32> to vector<16x128xbf16>
    %c0_34 = arith.constant 0 : index
    %c0_35 = arith.constant 0 : index
    %72 = vector.load %arg11[%c0_34, %c0_35] : memref<128x128xbf16, #tpu.memory_space<vmem>>, vector<128x128xbf16>
    %cst_36 = arith.constant dense<0.000000e+00> : vector<16x128xf32>
    %73 = tpu.matmul %37, %72, %cst_36 {dimension_numbers = #tpu.dot_dimension_numbers<[1], [0], [0], [1], [0, 0, 1, 1], [], []>} : vector<16x128xbf16>, vector<128x128xbf16>, vector<16x128xf32> -> vector<16x128xf32>
    %c0_37 = arith.constant 0 : index
    %c0_38 = arith.constant 0 : index
    %74 = vector.load %arg12[%c0_37, %c0_38] : memref<128x128xbf16, #tpu.memory_space<vmem>>, vector<128x128xbf16>
    %cst_39 = arith.constant dense<0.000000e+00> : vector<16x128xf32>
    %75 = tpu.matmul %71, %74, %cst_39 {dimension_numbers = #tpu.dot_dimension_numbers<[1], [0], [0], [1], [0, 0, 1, 1], [], []>} : vector<16x128xbf16>, vector<128x128xbf16>, vector<16x128xf32> -> vector<16x128xf32>
    %76 = arith.addf %73, %75 : vector<16x128xf32>
    %c0_40 = arith.constant 0 : index
    %c0_41 = arith.constant 0 : index
    %77 = vector.load %arg13[%c0_40, %c0_41] : memref<1x128xf32, #tpu.memory_space<vmem>>, vector<1x128xf32>
    %78 = vector.broadcast %77 : vector<1x128xf32> to vector<16x128xf32>
    %79 = arith.addf %76, %78 : vector<16x128xf32>
    %c0_42 = arith.constant 0 : index
    %c0_43 = arith.constant 0 : index
    %80 = vector.load %arg14[%c0_42, %c0_43] : memref<1x128xf32, #tpu.memory_space<vmem>>, vector<1x128xf32>
    %c0_44 = arith.constant 0 : index
    %c0_45 = arith.constant 0 : index
    %81 = vector.load %arg15[%c0_44, %c0_45] : memref<1x128xf32, #tpu.memory_space<vmem>>, vector<1x128xf32>
    %cst_46 = arith.constant dense<0.000000e+00> : vector<16xf32>
    %82 = vector.multi_reduction <add>, %79, %cst_46 [1] : vector<16x128xf32> to vector<16xf32>
    %83 = vector.shape_cast %82 : vector<16xf32> to vector<16x1xf32>
    %84 = arith.mulf %79, %79 : vector<16x128xf32>
    %cst_47 = arith.constant dense<0.000000e+00> : vector<16xf32>
    %85 = vector.multi_reduction <add>, %84, %cst_47 [1] : vector<16x128xf32> to vector<16xf32>
    %86 = vector.shape_cast %85 : vector<16xf32> to vector<16x1xf32>
    %cst_48 = arith.constant 1.562500e-02 : f32
    %87 = vector.broadcast %cst_48 : f32 to vector<16x1xf32>
    %88 = arith.mulf %83, %87 : vector<16x1xf32>
    %cst_49 = arith.constant 1.562500e-02 : f32
    %89 = vector.broadcast %cst_49 : f32 to vector<16x1xf32>
    %90 = arith.mulf %86, %89 : vector<16x1xf32>
    %91 = arith.mulf %88, %88 : vector<16x1xf32>
    %92 = arith.subf %90, %91 : vector<16x1xf32>
    %cst_50 = arith.constant 0.000000e+00 : f32
    %93 = vector.broadcast %cst_50 : f32 to vector<16x1xf32>
    %94 = arith.maximumf %92, %93 : vector<16x1xf32>
    %95 = vector.broadcast %88 : vector<16x1xf32> to vector<16x128xf32>
    %96 = arith.subf %79, %95 : vector<16x128xf32>
    %cst_51 = arith.constant 9.99999974E-6 : f32
    %97 = vector.broadcast %cst_51 : f32 to vector<16x1xf32>
    %98 = arith.addf %94, %97 : vector<16x1xf32>
    %99 = math.rsqrt %98 : vector<16x1xf32>
    %100 = vector.broadcast %99 : vector<16x1xf32> to vector<16x128xf32>
    %101 = arith.mulf %96, %100 : vector<16x128xf32>
    %102 = vector.broadcast %80 : vector<1x128xf32> to vector<16x128xf32>
    %103 = arith.mulf %101, %102 : vector<16x128xf32>
    %104 = vector.broadcast %81 : vector<1x128xf32> to vector<16x128xf32>
    %105 = arith.addf %103, %104 : vector<16x128xf32>
    %cst_52 = arith.constant 0.000000e+00 : f32
    %106 = vector.broadcast %cst_52 : f32 to vector<16x128xf32>
    %107 = arith.maximumf %105, %106 : vector<16x128xf32>
    %108 = arith.truncf %107 : vector<16x128xf32> to vector<16x128xbf16>
    %c0_53 = arith.constant 0 : index
    %c0_54 = arith.constant 0 : index
    %109 = vector.load %arg16[%c0_53, %c0_54] : memref<128x128xbf16, #tpu.memory_space<vmem>>, vector<128x128xbf16>
    %cst_55 = arith.constant dense<0.000000e+00> : vector<16x128xf32>
    %110 = tpu.matmul %108, %109, %cst_55 {dimension_numbers = #tpu.dot_dimension_numbers<[1], [0], [0], [1], [0, 0, 1, 1], [], []>} : vector<16x128xbf16>, vector<128x128xbf16>, vector<16x128xf32> -> vector<16x128xf32>
    %c0_56 = arith.constant 0 : index
    %c0_57 = arith.constant 0 : index
    %111 = vector.load %arg17[%c0_56, %c0_57] : memref<1x128xf32, #tpu.memory_space<vmem>>, vector<1x128xf32>
    %112 = vector.broadcast %111 : vector<1x128xf32> to vector<16x128xf32>
    %113 = arith.addf %110, %112 : vector<16x128xf32>
    %114 = arith.truncf %113 : vector<16x128xf32> to vector<16x128xbf16>
    %c0_58 = arith.constant 0 : index
    %c0_59 = arith.constant 0 : index
    %115 = vector.load %arg18[%c0_58, %c0_59] : memref<16x128xbf16, #tpu.memory_space<vmem>>, vector<16x128xbf16>
    tpu.vector_store %arg18[%c0_58, %c0_59], %114 {strides = array<i32>} : memref<16x128xbf16, #tpu.memory_space<vmem>>, vector<16x128xbf16>,
    return
  }
  func.func @transform_0(%arg0: i32) -> (i32, i32) {
    %c0_i32 = arith.constant 0 : i32
    %c0_i32_0 = arith.constant 0 : i32
    return %arg0, %c0_i32 : i32, i32
  }
  func.func @transform_1(%arg0: i32) -> (i32, i32) {
    %c0_i32 = arith.constant 0 : i32
    %c0_i32_0 = arith.constant 0 : i32
    return %arg0, %c0_i32 : i32, i32
  }
  func.func @transform_2(%arg0: i32) -> (i32, i32) {
    %c0_i32 = arith.constant 0 : i32
    %c0_i32_0 = arith.constant 0 : i32
    %c0_i32_1 = arith.constant 0 : i32
    return %c0_i32, %c0_i32_0 : i32, i32
  }
  func.func @transform_3(%arg0: i32) -> (i32, i32) {
    %c0_i32 = arith.constant 0 : i32
    %c0_i32_0 = arith.constant 0 : i32
    %c0_i32_1 = arith.constant 0 : i32
    return %c0_i32, %c0_i32_0 : i32, i32
  }
  func.func @transform_4(%arg0: i32) -> (i32, i32) {
    %c0_i32 = arith.constant 0 : i32
    %c0_i32_0 = arith.constant 0 : i32
    %c0_i32_1 = arith.constant 0 : i32
    return %c0_i32, %c0_i32_0 : i32, i32
  }
  func.func @transform_5(%arg0: i32) -> (i32, i32) {
    %c0_i32 = arith.constant 0 : i32
    %c0_i32_0 = arith.constant 0 : i32
    %c0_i32_1 = arith.constant 0 : i32
    return %c0_i32, %c0_i32_0 : i32, i32
  }
  func.func @transform_6(%arg0: i32) -> (i32, i32) {
    %c0_i32 = arith.constant 0 : i32
    %c0_i32_0 = arith.constant 0 : i32
    %c0_i32_1 = arith.constant 0 : i32
    return %c0_i32, %c0_i32_0 : i32, i32
  }
  func.func @transform_7(%arg0: i32) -> (i32, i32) {
    %c0_i32 = arith.constant 0 : i32
    %c0_i32_0 = arith.constant 0 : i32
    %c0_i32_1 = arith.constant 0 : i32
    return %c0_i32, %c0_i32_0 : i32, i32
  }
  func.func @transform_8(%arg0: i32) -> (i32, i32) {
    %c0_i32 = arith.constant 0 : i32
    %c0_i32_0 = arith.constant 0 : i32
    %c0_i32_1 = arith.constant 0 : i32
    return %c0_i32, %c0_i32_0 : i32, i32
  }
  func.func @transform_9(%arg0: i32) -> (i32, i32) {
    %c0_i32 = arith.constant 0 : i32
    %c0_i32_0 = arith.constant 0 : i32
    %c0_i32_1 = arith.constant 0 : i32
    return %c0_i32, %c0_i32_0 : i32, i32
  }
  func.func @transform_10(%arg0: i32) -> (i32, i32) {
    %c0_i32 = arith.constant 0 : i32
    %c0_i32_0 = arith.constant 0 : i32
    %c0_i32_1 = arith.constant 0 : i32
    return %c0_i32, %c0_i32_0 : i32, i32
  }
  func.func @transform_11(%arg0: i32) -> (i32, i32) {
    %c0_i32 = arith.constant 0 : i32
    %c0_i32_0 = arith.constant 0 : i32
    %c0_i32_1 = arith.constant 0 : i32
    return %c0_i32, %c0_i32_0 : i32, i32
  }
  func.func @transform_12(%arg0: i32) -> (i32, i32) {
    %c0_i32 = arith.constant 0 : i32
    %c0_i32_0 = arith.constant 0 : i32
    %c0_i32_1 = arith.constant 0 : i32
    return %c0_i32, %c0_i32_0 : i32, i32
  }
  func.func @transform_13(%arg0: i32) -> (i32, i32) {
    %c0_i32 = arith.constant 0 : i32
    %c0_i32_0 = arith.constant 0 : i32
    %c0_i32_1 = arith.constant 0 : i32
    return %c0_i32, %c0_i32_0 : i32, i32
  }
  func.func @transform_14(%arg0: i32) -> (i32, i32) {
    %c0_i32 = arith.constant 0 : i32
    %c0_i32_0 = arith.constant 0 : i32
    %c0_i32_1 = arith.constant 0 : i32
    return %c0_i32, %c0_i32_0 : i32, i32
  }
  func.func @transform_15(%arg0: i32) -> (i32, i32) {
    %c0_i32 = arith.constant 0 : i32
    %c0_i32_0 = arith.constant 0 : i32
    %c0_i32_1 = arith.constant 0 : i32
    return %c0_i32, %c0_i32_0 : i32, i32
  }
  func.func @transform_16(%arg0: i32) -> (i32, i32) {
    %c0_i32 = arith.constant 0 : i32
    %c0_i32_0 = arith.constant 0 : i32
    %c0_i32_1 = arith.constant 0 : i32
    return %c0_i32, %c0_i32_0 : i32, i32
  }
  func.func @transform_17(%arg0: i32) -> (i32, i32) {
    %c0_i32 = arith.constant 0 : i32
    %c0_i32_0 = arith.constant 0 : i32
    return %arg0, %c0_i32 : i32, i32
  }
}

</mosaic_0001>

<llo_original>
// kernel: tpu_custom_call.1
$region0: #{tpu_custom_call.1}
  #allocation0 [shape = 'u32[]', space=smem, size = 0x4, offset = 0x4, fixed_abs, tag = 'smem constant byte address 0x4 - core index']
  #allocation1 [shape = 'u32[72,128]{1,0:T(1,128)}', space=vmem, size = 0x9000, scoped, tag = 'internal scratch']
  %s0 = inlined_call_operand.hbm [shape: f32[16,128], index: 0, kind: input, shape index: {}]
  %s1 = inlined_call_operand.hbm [shape: f32[16,128], index: 1, kind: input, shape index: {}]
  %s2 = inlined_call_operand.hbm [shape: bf16[128,128], index: 2, kind: input, shape index: {}]
  %s3 = inlined_call_operand.vmem [shape: f32[1,128], index: 3, kind: input, shape index: {}]
  %s4 = inlined_call_operand.vmem [shape: f32[1,128], index: 4, kind: input, shape index: {}]
  %s5 = inlined_call_operand.vmem [shape: f32[1,128], index: 5, kind: input, shape index: {}]
  %s6 = inlined_call_operand.hbm [shape: bf16[128,128], index: 6, kind: input, shape index: {}]
  %s7 = inlined_call_operand.vmem [shape: f32[1,128], index: 7, kind: input, shape index: {}]
  %s8 = inlined_call_operand.vmem [shape: f32[1,128], index: 8, kind: input, shape index: {}]
  %s9 = inlined_call_operand.vmem [shape: f32[1,128], index: 9, kind: input, shape index: {}]
  %s10 = inlined_call_operand.hbm [shape: bf16[128,128], index: 10, kind: input, shape index: {}]
  %s11 = inlined_call_operand.hbm [shape: bf16[128,128], index: 11, kind: input, shape index: {}]
  %s12 = inlined_call_operand.vmem [shape: f32[1,128], index: 12, kind: input, shape index: {}]
  %s13 = inlined_call_operand.vmem [shape: f32[1,128], index: 13, kind: input, shape index: {}]
  %s14 = inlined_call_operand.vmem [shape: f32[1,128], index: 14, kind: input, shape index: {}]
  %s15 = inlined_call_operand.hbm [shape: bf16[128,128], index: 15, kind: input, shape index: {}]
  %s16 = inlined_call_operand.vmem [shape: f32[1,128], index: 16, kind: input, shape index: {}]
  %s17 = inlined_call_operand.hbm [shape: bf16[16,128], index: 17, kind: output, shape index: {}]
  %s18 = sld [smem:[#allocation0]]
  $region106: #{tpu_custom_call.1} parent=0
    _
  %s20 = ssub.s32 1, %s18
  %s21 = scalar_select 0, %s20, %s18
  $region1: #{tpu_custom_call.1} parent=0
    #allocation2 [shape = 'u8[8192]{0}', space=vmem, size = 0x2000, scoped, tag = 'input window, operand 0, single buffered']
    #allocation3 [shape = 's32[1]{0}', space=sflag, size = 0x4, scoped, tag = 'scoped memory for tpu_custom_call.1']
    #allocation4 [shape = 's32[1]{0}', space=sflag, size = 0x4, scoped, tag = 'scoped memory for tpu_custom_call.1']
    #allocation5 [shape = 'u8[8192]{0}', space=vmem, size = 0x2000, scoped, tag = 'input window, operand 1, single buffered']
    #allocation6 [shape = 's32[1]{0}', space=sflag, size = 0x4, scoped, tag = 'scoped memory for tpu_custom_call.1']
    #allocation7 [shape = 'u8[32768]{0}', space=vmem, size = 0x8000, scoped, tag = 'input window, operand 2, single buffered']
    #allocation8 [shape = 'u8[32768]{0}', space=vmem, size = 0x8000, scoped, tag = 'input window, operand 6, single buffered']
    #allocation9 [shape = 's32[1]{0}', space=sflag, size = 0x4, scoped, tag = 'scoped memory for tpu_custom_call.1']
    #allocation10 [shape = 'u8[32768]{0}', space=vmem, size = 0x8000, scoped, tag = 'input window, operand 10, single buffered']
    #allocation11 [shape = 'u8[32768]{0}', space=vmem, size = 0x8000, scoped, tag = 'input window, operand 11, single buffered']
    #allocation12 [shape = 's32[1]{0}', space=sflag, size = 0x4, scoped, tag = 'scoped memory for tpu_custom_call.1']
    #allocation13 [shape = 'u8[32768]{0}', space=vmem, size = 0x8000, scoped, tag = 'input window, operand 15, single buffered']
    #allocation14 [shape = 'u8[4096]{0}', space=vmem, size = 0x1000, scoped, tag = 'output window, operand 0, single buffered']
    %22 = vsyncpa [#allocation3], 0
    %23 = vsyncpa [#allocation6], 0
    %24 = vsyncpa [#allocation9], 0
    %25 = vsyncpa [#allocation12], 0
    %26 = vsyncpa [#allocation4], 0
    // Predicated region
    $region2: #{tpu_custom_call.1} parent=1 // pred_check
      _
    $region3: #{tpu_custom_call.1} parent=1 // pred_check_branch
      %28 = sbr.rel (0) target = $region5
    $region4: #{tpu_custom_call.1} parent=1 // pred_region
      %30 = vsyncadd [#allocation3], 0
      %s31 = sshll.u32 %s0, 4
      %s32 = int_to_ptr.hbm [resolvable:$true] %s31
      %s33 = sshll.u32 [#allocation2], 4
      %s34 = int_to_ptr.vmem [resolvable:$true] %s33
      %39 = dma.hbm_to_vmem [thread:$0]  %s32, 256, %s34, [#allocation3], 128, 128, 8
    $region5: #{tpu_custom_call.1} parent=1 // pred_fallthru
      _
    // Predicated region
    $region6: #{tpu_custom_call.1} parent=1 // pred_check
      _
    $region7: #{tpu_custom_call.1} parent=1 // pred_check_branch
      %41 = sbr.rel (0) target = $region9
    $region8: #{tpu_custom_call.1} parent=1 // pred_region
      %43 = vsyncadd [#allocation6], 0
      %s44 = sshll.u32 %s1, 4
      %s45 = int_to_ptr.hbm [resolvable:$true] %s44
      %s46 = sshll.u32 [#allocation5], 4
      %s47 = int_to_ptr.vmem [resolvable:$true] %s46
      %52 = dma.hbm_to_vmem [thread:$0]  %s45, 256, %s47, [#allocation6], 128, 128, 8
    $region9: #{tpu_custom_call.1} parent=1 // pred_fallthru
      _
    // Predicated region
    $region10: #{tpu_custom_call.1} parent=1 // pred_check
      _
    $region11: #{tpu_custom_call.1} parent=1 // pred_check_branch
      %54 = sbr.rel (0) target = $region13
    $region12: #{tpu_custom_call.1} parent=1 // pred_region
      %56 = vsyncadd [#allocation6], 0
      %s57 = sshll.u32 %s2, 4
      %s58 = int_to_ptr.hbm [resolvable:$true] %s57
      %s59 = sshll.u32 [#allocation7], 4
      %s60 = int_to_ptr.vmem [resolvable:$true] %s59
      %65 = dma.hbm_to_vmem [thread:$0]  %s58, 1024, %s60, [#allocation6], 64, 64, 4
    $region13: #{tpu_custom_call.1} parent=1 // pred_fallthru
      _
    // Predicated region
    $region14: #{tpu_custom_call.1} parent=1 // pred_check
      _
    $region15: #{tpu_custom_call.1} parent=1 // pred_check_branch
      %67 = sbr.rel (0) target = $region17
    $region16: #{tpu_custom_call.1} parent=1 // pred_region
      _
    $region17: #{tpu_custom_call.1} parent=1 // pred_fallthru
      _
    // Predicated region
    $region18: #{tpu_custom_call.1} parent=1 // pred_check
      _
    $region19: #{tpu_custom_call.1} parent=1 // pred_check_branch
      %69 = sbr.rel (0) target = $region21
    $region20: #{tpu_custom_call.1} parent=1 // pred_region
      _
    $region21: #{tpu_custom_call.1} parent=1 // pred_fallthru
      _
    // Predicated region
    $region22: #{tpu_custom_call.1} parent=1 // pred_check
      _
    $region23: #{tpu_custom_call.1} parent=1 // pred_check_branch
      %71 = sbr.rel (0) target = $region25
    $region24: #{tpu_custom_call.1} parent=1 // pred_region
      _
    $region25: #{tpu_custom_call.1} parent=1 // pred_fallthru
      _
    // Predicated region
    $region26: #{tpu_custom_call.1} parent=1 // pred_check
      _
    $region27: #{tpu_custom_call.1} parent=1 // pred_check_branch
      %73 = sbr.rel (0) target = $region29
    $region28: #{tpu_custom_call.1} parent=1 // pred_region
      %75 = vsyncadd [#allocation9], 0
      %s76 = sshll.u32 %s6, 4
      %s77 = int_to_ptr.hbm [resolvable:$true] %s76
      %s78 = sshll.u32 [#allocation8], 4
      %s79 = int_to_ptr.vmem [resolvable:$true] %s78
      %84 = dma.hbm_to_vmem [thread:$0]  %s77, 1024, %s79, [#allocation9], 64, 64, 4
    $region29: #{tpu_custom_call.1} parent=1 // pred_fallthru
      _
    // Predicated region
    $region30: #{tpu_custom_call.1} parent=1 // pred_check
      _
    $region31: #{tpu_custom_call.1} parent=1 // pred_check_branch
      %86 = sbr.rel (0) target = $region33
    $region32: #{tpu_custom_call.1} parent=1 // pred_region
      _
    $region33: #{tpu_custom_call.1} parent=1 // pred_fallthru
      _
    // Predicated region
    $region34: #{tpu_custom_call.1} parent=1 // pred_check
      _
    $region35: #{tpu_custom_call.1} parent=1 // pred_check_branch
      %88 = sbr.rel (0) target = $region37
    $region36: #{tpu_custom_call.1} parent=1 // pred_region
      _
    $region37: #{tpu_custom_call.1} parent=1 // pred_fallthru
      _
    // Predicated region
    $region38: #{tpu_custom_call.1} parent=1 // pred_check
      _
    $region39: #{tpu_custom_call.1} parent=1 // pred_check_branch
      %90 = sbr.rel (0) target = $region41
    $region40: #{tpu_custom_call.1} parent=1 // pred_region
      _
    $region41: #{tpu_custom_call.1} parent=1 // pred_fallthru
      _
    // Predicated region
    $region42: #{tpu_custom_call.1} parent=1 // pred_check
      _
    $region43: #{tpu_custom_call.1} parent=1 // pred_check_branch
      %92 = sbr.rel (0) target = $region45
    $region44: #{tpu_custom_call.1} parent=1 // pred_region
      %94 = vsyncadd [#allocation9], 0
      %s95 = sshll.u32 %s10, 4
      %s96 = int_to_ptr.hbm [resolvable:$true] %s95
      %s97 = sshll.u32 [#allocation10], 4
      %s98 = int_to_ptr.vmem [resolvable:$true] %s97
      %103 = dma.hbm_to_vmem [thread:$0]  %s96, 1024, %s98, [#allocation9], 64, 64, 4
    $region45: #{tpu_custom_call.1} parent=1 // pred_fallthru
      _
    // Predicated region
    $region46: #{tpu_custom_call.1} parent=1 // pred_check
      _
    $region47: #{tpu_custom_call.1} parent=1 // pred_check_branch
      %105 = sbr.rel (0) target = $region49
    $region48: #{tpu_custom_call.1} parent=1 // pred_region
      %107 = vsyncadd [#allocation12], 0
      %s108 = sshll.u32 %s11, 4
      %s109 = int_to_ptr.hbm [resolvable:$true] %s108
      %s110 = sshll.u32 [#allocation11], 4
      %s111 = int_to_ptr.vmem [resolvable:$true] %s110
      %116 = dma.hbm_to_vmem [thread:$0]  %s109, 1024, %s111, [#allocation12], 64, 64, 4
    $region49: #{tpu_custom_call.1} parent=1 // pred_fallthru
      _
    // Predicated region
    $region50: #{tpu_custom_call.1} parent=1 // pred_check
      _
    $region51: #{tpu_custom_call.1} parent=1 // pred_check_branch
      %118 = sbr.rel (0) target = $region53
    $region52: #{tpu_custom_call.1} parent=1 // pred_region
      _
    $region53: #{tpu_custom_call.1} parent=1 // pred_fallthru
      _
    // Predicated region
    $region54: #{tpu_custom_call.1} parent=1 // pred_check
      _
    $region55: #{tpu_custom_call.1} parent=1 // pred_check_branch
      %120 = sbr.rel (0) target = $region57
    $region56: #{tpu_custom_call.1} parent=1 // pred_region
      _
    $region57: #{tpu_custom_call.1} parent=1 // pred_fallthru
      _
    // Predicated region
    $region58: #{tpu_custom_call.1} parent=1 // pred_check
      _
    $region59: #{tpu_custom_call.1} parent=1 // pred_check_branch
      %122 = sbr.rel (0) target = $region61
    $region60: #{tpu_custom_call.1} parent=1 // pred_region
      _
    $region61: #{tpu_custom_call.1} parent=1 // pred_fallthru
      _
    // Predicated region
    $region62: #{tpu_custom_call.1} parent=1 // pred_check
      _
    $region63: #{tpu_custom_call.1} parent=1 // pred_check_branch
      %124 = sbr.rel (0) target = $region65
    $region64: #{tpu_custom_call.1} parent=1 // pred_region
      %126 = vsyncadd [#allocation12], 0
      %s127 = sshll.u32 %s15, 4
      %s128 = int_to_ptr.hbm [resolvable:$true] %s127
      %s129 = sshll.u32 [#allocation13], 4
      %s130 = int_to_ptr.vmem [resolvable:$true] %s129
      %135 = dma.hbm_to_vmem [thread:$0]  %s128, 1024, %s130, [#allocation12], 64, 64, 4
    $region65: #{tpu_custom_call.1} parent=1 // pred_fallthru
      _
    // Predicated region
    $region66: #{tpu_custom_call.1} parent=1 // pred_check
      _
    $region67: #{tpu_custom_call.1} parent=1 // pred_check_branch
      %137 = sbr.rel (0) target = $region69
    $region68: #{tpu_custom_call.1} parent=1 // pred_region
      _
    $region69: #{tpu_custom_call.1} parent=1 // pred_fallthru
      _
    // Predicated region
    $region70: #{tpu_custom_call.1} parent=1 // pred_check
      _
    $region71: #{tpu_custom_call.1} parent=1 // pred_check_branch
      %139 = sbr.rel (0) target = $region73
    $region72: #{tpu_custom_call.1} parent=1 // pred_region
      %141 = dma.done [#allocation3], 256
    $region73: #{tpu_custom_call.1} parent=1 // pred_fallthru
      _
    // Predicated region
    $region74: #{tpu_custom_call.1} parent=1 // pred_check
      _
    $region75: #{tpu_custom_call.1} parent=1 // pred_check_branch
      %143 = sbr.rel (0) target = $region77
    $region76: #{tpu_custom_call.1} parent=1 // pred_region
      %145 = dma.done [#allocation6], 256
    $region77: #{tpu_custom_call.1} parent=1 // pred_fallthru
      _
    // Predicated region
    $region78: #{tpu_custom_call.1} parent=1 // pred_check
      _
    $region79: #{tpu_custom_call.1} parent=1 // pred_check_branch
      %147 = sbr.rel (0) target = $region81
    $region80: #{tpu_custom_call.1} parent=1 // pred_region
      %149 = dma.done [#allocation6], 1024
    $region81: #{tpu_custom_call.1} parent=1 // pred_fallthru
      _
    // Predicated region
    $region82: #{tpu_custom_call.1} parent=1 // pred_check
      _
    $region83: #{tpu_custom_call.1} parent=1 // pred_check_branch
      %151 = sbr.rel (0) target = $region85
    $region84: #{tpu_custom_call.1} parent=1 // pred_region
      %153 = dma.done [#allocation9], 1024
    $region85: #{tpu_custom_call.1} parent=1 // pred_fallthru
      _
    // Predicated region
    $region86: #{tpu_custom_call.1} parent=1 // pred_check
      _
    $region87: #{tpu_custom_call.1} parent=1 // pred_check_branch
      %155 = sbr.rel (0) target = $region89
    $region88: #{tpu_custom_call.1} parent=1 // pred_region
      %157 = dma.done [#allocation9], 1024
    $region89: #{tpu_custom_call.1} parent=1 // pred_fallthru
      _
    // Predicated region
    $region90: #{tpu_custom_call.1} parent=1 // pred_check
      _
    $region91: #{tpu_custom_call.1} parent=1 // pred_check_branch
      %159 = sbr.rel (0) target = $region93
    $region92: #{tpu_custom_call.1} parent=1 // pred_region
      %161 = dma.done [#allocation12], 1024
    $region93: #{tpu_custom_call.1} parent=1 // pred_fallthru
      _
    // Predicated region
    $region94: #{tpu_custom_call.1} parent=1 // pred_check
      _
    $region95: #{tpu_custom_call.1} parent=1 // pred_check_branch
      %163 = sbr.rel (0) target = $region97
    $region96: #{tpu_custom_call.1} parent=1 // pred_region
      %165 = dma.done [#allocation12], 1024
    $region97: #{tpu_custom_call.1} parent=1 // pred_fallthru
      _
    %v166 = vld [vmem:[#allocation2] sm:$0xff]
    %v167 = vld [vmem:[#allocation2 + $0x8] sm:$0xff]
    %v168 = vpack.c.bf16 %v167, %v166
    %v169 = vld [vmem:[#allocation5] sm:$0xff]
    %v170 = vld [vmem:[#allocation5 + $0x8] sm:$0xff]
    %v171 = vpack.c.bf16 %v170, %v169
    %v172 = vld [vmem:[#allocation7] sm:$0xf]
    %v173 = vld [vmem:[#allocation7 + $0x4] sm:$0xf]
    %v174 = vld [vmem:[#allocation7 + $0x8] sm:$0xf]
    %v175 = vld [vmem:[#allocation7 + $0xc] sm:$0xf]
    %v176 = vld [vmem:[#allocation7 + $0x10] sm:$0xf]
    %v177 = vld [vmem:[#allocation7 + $0x14] sm:$0xf]
    %v178 = vld [vmem:[#allocation7 + $0x18] sm:$0xf]
    %v179 = vld [vmem:[#allocation7 + $0x1c] sm:$0xf]
    %v180 = vld [vmem:[#allocation7 + $0x20] sm:$0xf]
    %v181 = vld [vmem:[#allocation7 + $0x24] sm:$0xf]
    %v182 = vld [vmem:[#allocation7 + $0x28] sm:$0xf]
    %v183 = vld [vmem:[#allocation7 + $0x2c] sm:$0xf]
    %v184 = vld [vmem:[#allocation7 + $0x30] sm:$0xf]
    %v185 = vld [vmem:[#allocation7 + $0x34] sm:$0xf]
    %v186 = vld [vmem:[#allocation7 + $0x38] sm:$0xf]
    %v187 = vld [vmem:[#allocation7 + $0x3c] sm:$0xf]
    %v188 = vld [vmem:[%s3] sm:$0x1]
    %v190 = vperm.slane %v188, 0
    %v208 = vunpack.c.l.b16 %v172
    %v209 = vunpack.c.l.b16 %v173
    %v210 = vunpack.c.l.b16 %v174
    %v211 = vunpack.c.l.b16 %v175
    %v212 = vunpack.c.l.b16 %v176
    %v213 = vunpack.c.l.b16 %v177
    %v214 = vunpack.c.l.b16 %v178
    %v215 = vunpack.c.l.b16 %v179
    %v216 = vunpack.c.l.b16 %v180
    %v217 = vunpack.c.l.b16 %v181
    %v218 = vunpack.c.l.b16 %v182
    %v219 = vunpack.c.l.b16 %v183
    %v220 = vunpack.c.l.b16 %v184
    %v221 = vunpack.c.l.b16 %v185
    %v222 = vunpack.c.l.b16 %v186
    %v223 = vunpack.c.l.b16 %v187
    %v224 = vpack.c.b16 %v209, %v208
    %v225 = vpack.c.b16 %v211, %v210
    %v226 = vpack.c.b16 %v213, %v212
    %v227 = vpack.c.b16 %v215, %v214
    %v228 = vpack.c.b16 %v217, %v216
    %v229 = vpack.c.b16 %v219, %v218
    %v230 = vpack.c.b16 %v221, %v220
    %v231 = vpack.c.b16 %v223, %v222
    %240 = vmatpush.bf16.msra.mxu0 %v231
    %241 = vmatpush.bf16.msra.mxu0 %v230
    %242 = vmatpush.bf16.msra.mxu0 %v229
    %243 = vmatpush.bf16.msra.mxu0 %v228
    %244 = vmatpush.bf16.msra.mxu0 %v227
    %245 = vmatpush.bf16.msra.mxu0 %v226
    %246 = vmatpush.bf16.msra.mxu0 %v225
    %247 = vmatpush.bf16.msra.mxu0 %v224
    %248 = vmatmul.bf16.gmra.mxu0 %v168
    %v249 = vpop.f32.mrf.mxu0
    %v250 = vadd.f32 %v190, %v249
    %v251 = vpop.f32.mrf.mxu0
    %v252 = vadd.f32 %v190, %v251
    %253 = vdwg.mxu0
    %v254 = vld [vmem:[%s4] sm:$0x1]
    %v255 = vld [vmem:[%s5] sm:$0x1]
    %256 = vadd.xlane.f32.xlu0 %v250
    %v257 = vpop.xlane.xlu0 %256
    %258 = vadd.xlane.f32.xlu0 %v252
    %v259 = vpop.xlane.xlu0 %258
    %v260 = vmul.f32 %v250, %v250
    %v261 = vmul.f32 %v252, %v252
    %262 = vadd.xlane.f32.xlu0 %v260
    %v263 = vpop.xlane.xlu0 %262
    %264 = vadd.xlane.f32.xlu0 %v261
    %v265 = vpop.xlane.xlu0 %264
    %v266 = vmul.f32 %v257, 0.015625
    %v267 = vmul.f32 %v259, 0.015625
    %v268 = vmul.f32 %v263, 0.015625
    %v269 = vmul.f32 %v265, 0.015625
    %v270 = vmul.f32 %v266, %v266
    %v271 = vmul.f32 %v267, %v267
    %v272 = vsub.f32 %v268, %v270
    %v273 = vsub.f32 %v269, %v271
    %v274 = vmax.f32 %v272, 0.0
    %v275 = vmax.f32 %v273, 0.0
    %v276 = vsub.f32 %v250, %v266
    %v277 = vsub.f32 %v252, %v267
    %v278 = vadd.f32 %v274, 1e-05
    %v279 = vadd.f32 %v275, 1e-05
    %v280 = vrsqrt.pop %v278
    %v281 = vmul.f32 %v280, %v278
    %v282 = vmul.f32 %v281, %v280
    %v283 = vmul.f32 0.5, %v282
    %v284 = vsub.f32 1.5, %v283
    %v285 = vmul.f32 %v280, %v284
    %vm286 = vweird.f32 %v278
    %vm287 = vweird.f32 %v280
    %vm288 = vmor %vm286, %vm287
    %v289 = vsel %vm288, %v280, %v285
    %v290 = vrsqrt.pop %v279
    %v291 = vmul.f32 %v290, %v279
    %v292 = vmul.f32 %v291, %v290
    %v293 = vmul.f32 0.5, %v292
    %v294 = vsub.f32 1.5, %v293
    %v295 = vmul.f32 %v290, %v294
    %vm296 = vweird.f32 %v279
    %vm297 = vweird.f32 %v290
    %vm298 = vmor %vm296, %vm297
    %v299 = vsel %vm298, %v290, %v295
    %v300 = vmul.f32 %v276, %v289
    %v301 = vmul.f32 %v277, %v299
    %v303 = vperm.slane %v254, 0
    %v305 = vmul.f32 %v300, %v303
    %v306 = vmul.f32 %v301, %v303
    %v308 = vperm.slane %v255, 0
    %v310 = vadd.f32 %v305, %v308
    %v311 = vadd.f32 %v306, %v308
    %v312 = vmax.f32 %v310, 0.0
    %v313 = vmax.f32 %v311, 0.0
    %v314 = vpack.c.bf16 %v313, %v312
    %v315 = vld [vmem:[#allocation8] sm:$0xf]
    %v316 = vld [vmem:[#allocation8 + $0x4] sm:$0xf]
    %v317 = vld [vmem:[#allocation8 + $0x8] sm:$0xf]
    %v318 = vld [vmem:[#allocation8 + $0xc] sm:$0xf]
    %v319 = vld [vmem:[#allocation8 + $0x10] sm:$0xf]
    %v320 = vld [vmem:[#allocation8 + $0x14] sm:$0xf]
    %v321 = vld [vmem:[#allocation8 + $0x18] sm:$0xf]
    %v322 = vld [vmem:[#allocation8 + $0x1c] sm:$0xf]
    %v323 = vld [vmem:[#allocation8 + $0x20] sm:$0xf]
    %v324 = vld [vmem:[#allocation8 + $0x24] sm:$0xf]
    %v325 = vld [vmem:[#allocation8 + $0x28] sm:$0xf]
    %v326 = vld [vmem:[#allocation8 + $0x2c] sm:$0xf]
    %v327 = vld [vmem:[#allocation8 + $0x30] sm:$0xf]
    %v328 = vld [vmem:[#allocation8 + $0x34] sm:$0xf]
    %v329 = vld [vmem:[#allocation8 + $0x38] sm:$0xf]
    %v330 = vld [vmem:[#allocation8 + $0x3c] sm:$0xf]
    %v331 = vld [vmem:[%s7] sm:$0x1]
    %v333 = vperm.slane %v331, 0
    %v351 = vunpack.c.l.b16 %v315
    %v352 = vunpack.c.l.b16 %v316
    %v353 = vunpack.c.l.b16 %v317
    %v354 = vunpack.c.l.b16 %v318
    %v355 = vunpack.c.l.b16 %v319
    %v356 = vunpack.c.l.b16 %v320
    %v357 = vunpack.c.l.b16 %v321
    %v358 = vunpack.c.l.b16 %v322
    %v359 = vunpack.c.l.b16 %v323
    %v360 = vunpack.c.l.b16 %v324
    %v361 = vunpack.c.l.b16 %v325
    %v362 = vunpack.c.l.b16 %v326
    %v363 = vunpack.c.l.b16 %v327
    %v364 = vunpack.c.l.b16 %v328
    %v365 = vunpack.c.l.b16 %v329
    %v366 = vunpack.c.l.b16 %v330
    %v367 = vpack.c.b16 %v352, %v351
    %v368 = vpack.c.b16 %v354, %v353
    %v369 = vpack.c.b16 %v356, %v355
    %v370 = vpack.c.b16 %v358, %v357
    %v371 = vpack.c.b16 %v360, %v359
    %v372 = vpack.c.b16 %v362, %v361
    %v373 = vpack.c.b16 %v364, %v363
    %v374 = vpack.c.b16 %v366, %v365
    %383 = vmatpush.bf16.msra.mxu0 %v374
    %384 = vmatpush.bf16.msra.mxu0 %v373
    %385 = vmatpush.bf16.msra.mxu0 %v372
    %386 = vmatpush.bf16.msra.mxu0 %v371
    %387 = vmatpush.bf16.msra.mxu0 %v370
    %388 = vmatpush.bf16.msra.mxu0 %v369
    %389 = vmatpush.bf16.msra.mxu0 %v368
    %390 = vmatpush.bf16.msra.mxu0 %v367
    %391 = vmatmul.bf16.gmra.mxu0 %v171
    %v392 = vpop.f32.mrf.mxu0
    %v393 = vadd.f32 %v333, %v392
    %v394 = vpop.f32.mrf.mxu0
    %v395 = vadd.f32 %v333, %v394
    %396 = vdwg.mxu0
    %v397 = vld [vmem:[%s8] sm:$0x1]
    %v398 = vld [vmem:[%s9] sm:$0x1]
    %399 = vadd.xlane.f32.xlu0 %v393
    %v400 = vpop.xlane.xlu0 %399
    %401 = vadd.xlane.f32.xlu0 %v395
    %v402 = vpop.xlane.xlu0 %401
    %v403 = vmul.f32 %v393, %v393
    %v404 = vmul.f32 %v395, %v395
    %405 = vadd.xlane.f32.xlu0 %v403
    %v406 = vpop.xlane.xlu0 %405
    %407 = vadd.xlane.f32.xlu0 %v404
    %v408 = vpop.xlane.xlu0 %407
    %v409 = vmul.f32 %v400, 0.015625
    %v410 = vmul.f32 %v402, 0.015625
    %v411 = vmul.f32 %v406, 0.015625
    %v412 = vmul.f32 %v408, 0.015625
    %v413 = vmul.f32 %v409, %v409
    %v414 = vmul.f32 %v410, %v410
    %v415 = vsub.f32 %v411, %v413
    %v416 = vsub.f32 %v412, %v414
    %v417 = vmax.f32 %v415, 0.0
    %v418 = vmax.f32 %v416, 0.0
    %v419 = vsub.f32 %v393, %v409
    %v420 = vsub.f32 %v395, %v410
    %v421 = vadd.f32 %v417, 1e-05
    %v422 = vadd.f32 %v418, 1e-05
    %v423 = vrsqrt.pop %v421
    %v424 = vmul.f32 %v423, %v421
    %v425 = vmul.f32 %v424, %v423
    %v426 = vmul.f32 0.5, %v425
    %v427 = vsub.f32 1.5, %v426
    %v428 = vmul.f32 %v423, %v427
    %vm429 = vweird.f32 %v421
    %vm430 = vweird.f32 %v423
    %vm431 = vmor %vm429, %vm430
    %v432 = vsel %vm431, %v423, %v428
    %v433 = vrsqrt.pop %v422
    %v434 = vmul.f32 %v433, %v422
    %v435 = vmul.f32 %v434, %v433
    %v436 = vmul.f32 0.5, %v435
    %v437 = vsub.f32 1.5, %v436
    %v438 = vmul.f32 %v433, %v437
    %vm439 = vweird.f32 %v422
    %vm440 = vweird.f32 %v433
    %vm441 = vmor %vm439, %vm440
    %v442 = vsel %vm441, %v433, %v438
    %v443 = vmul.f32 %v419, %v432
    %v444 = vmul.f32 %v420, %v442
    %v446 = vperm.slane %v397, 0
    %v448 = vmul.f32 %v443, %v446
    %v449 = vmul.f32 %v444, %v446
    %v451 = vperm.slane %v398, 0
    %v453 = vadd.f32 %v448, %v451
    %v454 = vadd.f32 %v449, %v451
    %v455 = vmax.f32 %v453, 0.0
    %v456 = vmax.f32 %v454, 0.0
    %v457 = vpack.c.bf16 %v456, %v455
    %v458 = vld [vmem:[#allocation10] sm:$0xf]
    %v459 = vld [vmem:[#allocation10 + $0x4] sm:$0xf]
    %v460 = vld [vmem:[#allocation10 + $0x8] sm:$0xf]
    %v461 = vld [vmem:[#allocation10 + $0xc] sm:$0xf]
    %v462 = vld [vmem:[#allocation10 + $0x10] sm:$0xf]
    %v463 = vld [vmem:[#allocation10 + $0x14] sm:$0xf]
    %v464 = vld [vmem:[#allocation10 + $0x18] sm:$0xf]
    %v465 = vld [vmem:[#allocation10 + $0x1c] sm:$0xf]
    %v466 = vld [vmem:[#allocation10 + $0x20] sm:$0xf]
    %v467 = vld [vmem:[#allocation10 + $0x24] sm:$0xf]
    %v468 = vld [vmem:[#allocation10 + $0x28] sm:$0xf]
    %v469 = vld [vmem:[#allocation10 + $0x2c] sm:$0xf]
    %v470 = vld [vmem:[#allocation10 + $0x30] sm:$0xf]
    %v471 = vld [vmem:[#allocation10 + $0x34] sm:$0xf]
    %v472 = vld [vmem:[#allocation10 + $0x38] sm:$0xf]
    %v473 = vld [vmem:[#allocation10 + $0x3c] sm:$0xf]
    %v474 = vld [vmem:[#allocation11] sm:$0xf]
    %v475 = vld [vmem:[#allocation11 + $0x4] sm:$0xf]
    %v476 = vld [vmem:[#allocation11 + $0x8] sm:$0xf]
    %v477 = vld [vmem:[#allocation11 + $0xc] sm:$0xf]
    %v478 = vld [vmem:[#allocation11 + $0x10] sm:$0xf]
    %v479 = vld [vmem:[#allocation11 + $0x14] sm:$0xf]
    %v480 = vld [vmem:[#allocation11 + $0x18] sm:$0xf]
    %v481 = vld [vmem:[#allocation11 + $0x1c] sm:$0xf]
    %v482 = vld [vmem:[#allocation11 + $0x20] sm:$0xf]
    %v483 = vld [vmem:[#allocation11 + $0x24] sm:$0xf]
    %v484 = vld [vmem:[#allocation11 + $0x28] sm:$0xf]
    %v485 = vld [vmem:[#allocation11 + $0x2c] sm:$0xf]
    %v486 = vld [vmem:[#allocation11 + $0x30] sm:$0xf]
    %v487 = vld [vmem:[#allocation11 + $0x34] sm:$0xf]
    %v488 = vld [vmem:[#allocation11 + $0x38] sm:$0xf]
    %v489 = vld [vmem:[#allocation11 + $0x3c] sm:$0xf]
    %v506 = vunpack.c.l.b16 %v474
    %v507 = vunpack.c.l.b16 %v475
    %v508 = vunpack.c.l.b16 %v476
    %v509 = vunpack.c.l.b16 %v477
    %v510 = vunpack.c.l.b16 %v478
    %v511 = vunpack.c.l.b16 %v479
    %v512 = vunpack.c.l.b16 %v480
    %v513 = vunpack.c.l.b16 %v481
    %v514 = vunpack.c.l.b16 %v482
    %v515 = vunpack.c.l.b16 %v483
    %v516 = vunpack.c.l.b16 %v484
    %v517 = vunpack.c.l.b16 %v485
    %v518 = vunpack.c.l.b16 %v486
    %v519 = vunpack.c.l.b16 %v487
    %v520 = vunpack.c.l.b16 %v488
    %v521 = vunpack.c.l.b16 %v489
    %v522 = vpack.c.b16 %v507, %v506
    %v523 = vpack.c.b16 %v509, %v508
    %v524 = vpack.c.b16 %v511, %v510
    %v525 = vpack.c.b16 %v513, %v512
    %v526 = vpack.c.b16 %v515, %v514
    %v527 = vpack.c.b16 %v517, %v516
    %v528 = vpack.c.b16 %v519, %v518
    %v529 = vpack.c.b16 %v521, %v520
    %538 = vmatpush.bf16.msra.mxu0 %v529
    %539 = vmatpush.bf16.msra.mxu0 %v528
    %540 = vmatpush.bf16.msra.mxu0 %v527
    %541 = vmatpush.bf16.msra.mxu0 %v526
    %542 = vmatpush.bf16.msra.mxu0 %v525
    %543 = vmatpush.bf16.msra.mxu0 %v524
    %544 = vmatpush.bf16.msra.mxu0 %v523
    %545 = vmatpush.bf16.msra.mxu0 %v522
    %546 = vmatmul.bf16.gmra.mxu0 %v457
    %v547 = vpop.f32.mrf.mxu0
    %v548 = vadd.f32 0.0, %v547
    %v549 = vpop.f32.mrf.mxu0
    %v550 = vadd.f32 0.0, %v549
    %551 = vdwg.mxu0
    %v568 = vunpack.c.l.b16 %v458
    %v569 = vunpack.c.l.b16 %v459
    %v570 = vunpack.c.l.b16 %v460
    %v571 = vunpack.c.l.b16 %v461
    %v572 = vunpack.c.l.b16 %v462
    %v573 = vunpack.c.l.b16 %v463
    %v574 = vunpack.c.l.b16 %v464
    %v575 = vunpack.c.l.b16 %v465
    %v576 = vunpack.c.l.b16 %v466
    %v577 = vunpack.c.l.b16 %v467
    %v578 = vunpack.c.l.b16 %v468
    %v579 = vunpack.c.l.b16 %v469
    %v580 = vunpack.c.l.b16 %v470
    %v581 = vunpack.c.l.b16 %v471
    %v582 = vunpack.c.l.b16 %v472
    %v583 = vunpack.c.l.b16 %v473
    %v584 = vpack.c.b16 %v569, %v568
    %v585 = vpack.c.b16 %v571, %v570
    %v586 = vpack.c.b16 %v573, %v572
    %v587 = vpack.c.b16 %v575, %v574
    %v588 = vpack.c.b16 %v577, %v576
    %v589 = vpack.c.b16 %v579, %v578
    %v590 = vpack.c.b16 %v581, %v580
    %v591 = vpack.c.b16 %v583, %v582
    %600 = vmatpush.bf16.msra.mxu0 %v591
    %601 = vmatpush.bf16.msra.mxu0 %v590
    %602 = vmatpush.bf16.msra.mxu0 %v589
    %603 = vmatpush.bf16.msra.mxu0 %v588
    %604 = vmatpush.bf16.msra.mxu0 %v587
    %605 = vmatpush.bf16.msra.mxu0 %v586
    %606 = vmatpush.bf16.msra.mxu0 %v585
    %607 = vmatpush.bf16.msra.mxu0 %v584
    %608 = vmatmul.bf16.gmra.mxu0 %v314
    %v609 = vpop.f32.mrf.mxu0
    %v610 = vadd.f32 %v548, %v609
    %v611 = vpop.f32.mrf.mxu0
    %v612 = vadd.f32 %v550, %v611
    %613 = vdwg.mxu0
    %v614 = vld [vmem:[%s12] sm:$0x1]
    %v616 = vperm.slane %v614, 0
    %v618 = vadd.f32 %v610, %v616
    %v619 = vadd.f32 %v612, %v616
    %v620 = vld [vmem:[%s13] sm:$0x1]
    %v621 = vld [vmem:[%s14] sm:$0x1]
    %622 = vadd.xlane.f32.xlu0 %v618
    %v623 = vpop.xlane.xlu0 %622
    %624 = vadd.xlane.f32.xlu0 %v619
    %v625 = vpop.xlane.xlu0 %624
    %v626 = vmul.f32 %v618, %v618
    %v627 = vmul.f32 %v619, %v619
    %628 = vadd.xlane.f32.xlu0 %v626
    %v629 = vpop.xlane.xlu0 %628
    %630 = vadd.xlane.f32.xlu0 %v627
    %v631 = vpop.xlane.xlu0 %630
    %v632 = vmul.f32 %v623, 0.015625
    %v633 = vmul.f32 %v625, 0.015625
    %v634 = vmul.f32 %v629, 0.015625
    %v635 = vmul.f32 %v631, 0.015625
    %v636 = vmul.f32 %v632, %v632
    %v637 = vmul.f32 %v633, %v633
    %v638 = vsub.f32 %v634, %v636
    %v639 = vsub.f32 %v635, %v637
    %v640 = vmax.f32 %v638, 0.0
    %v641 = vmax.f32 %v639, 0.0
    %v642 = vsub.f32 %v618, %v632
    %v643 = vsub.f32 %v619, %v633
    %v644 = vadd.f32 %v640, 1e-05
    %v645 = vadd.f32 %v641, 1e-05
    %v646 = vrsqrt.pop %v644
    %v647 = vmul.f32 %v646, %v644
    %v648 = vmul.f32 %v647, %v646
    %v649 = vmul.f32 0.5, %v648
    %v650 = vsub.f32 1.5, %v649
    %v651 = vmul.f32 %v646, %v650
    %vm652 = vweird.f32 %v644
    %vm653 = vweird.f32 %v646
    %vm654 = vmor %vm652, %vm653
    %v655 = vsel %vm654, %v646, %v651
    %v656 = vrsqrt.pop %v645
    %v657 = vmul.f32 %v656, %v645
    %v658 = vmul.f32 %v657, %v656
    %v659 = vmul.f32 0.5, %v658
    %v660 = vsub.f32 1.5, %v659
    %v661 = vmul.f32 %v656, %v660
    %vm662 = vweird.f32 %v645
    %vm663 = vweird.f32 %v656
    %vm664 = vmor %vm662, %vm663
    %v665 = vsel %vm664, %v656, %v661
    %v666 = vmul.f32 %v642, %v655
    %v667 = vmul.f32 %v643, %v665
    %v669 = vperm.slane %v620, 0
    %v671 = vmul.f32 %v666, %v669
    %v672 = vmul.f32 %v667, %v669
    %v674 = vperm.slane %v621, 0
    %v676 = vadd.f32 %v671, %v674
    %v677 = vadd.f32 %v672, %v674
    %v678 = vmax.f32 %v676, 0.0
    %v679 = vmax.f32 %v677, 0.0
    %v680 = vpack.c.bf16 %v679, %v678
    %v681 = vld [vmem:[#allocation13] sm:$0xf]
    %v682 = vld [vmem:[#allocation13 + $0x4] sm:$0xf]
    %v683 = vld [vmem:[#allocation13 + $0x8] sm:$0xf]
    %v684 = vld [vmem:[#allocation13 + $0xc] sm:$0xf]
    %v685 = vld [vmem:[#allocation13 + $0x10] sm:$0xf]
    %v686 = vld [vmem:[#allocation13 + $0x14] sm:$0xf]
    %v687 = vld [vmem:[#allocation13 + $0x18] sm:$0xf]
    %v688 = vld [vmem:[#allocation13 + $0x1c] sm:$0xf]
    %v689 = vld [vmem:[#allocation13 + $0x20] sm:$0xf]
    %v690 = vld [vmem:[#allocation13 + $0x24] sm:$0xf]
    %v691 = vld [vmem:[#allocation13 + $0x28] sm:$0xf]
    %v692 = vld [vmem:[#allocation13 + $0x2c] sm:$0xf]
    %v693 = vld [vmem:[#allocation13 + $0x30] sm:$0xf]
    %v694 = vld [vmem:[#allocation13 + $0x34] sm:$0xf]
    %v695 = vld [vmem:[#allocation13 + $0x38] sm:$0xf]
    %v696 = vld [vmem:[#allocation13 + $0x3c] sm:$0xf]
    %v697 = vld [vmem:[%s16] sm:$0x1]
    %v699 = vperm.slane %v697, 0
    %v717 = vunpack.c.l.b16 %v681
    %v718 = vunpack.c.l.b16 %v682
    %v719 = vunpack.c.l.b16 %v683
    %v720 = vunpack.c.l.b16 %v684
    %v721 = vunpack.c.l.b16 %v685
    %v722 = vunpack.c.l.b16 %v686
    %v723 = vunpack.c.l.b16 %v687
    %v724 = vunpack.c.l.b16 %v688
    %v725 = vunpack.c.l.b16 %v689
    %v726 = vunpack.c.l.b16 %v690
    %v727 = vunpack.c.l.b16 %v691
    %v728 = vunpack.c.l.b16 %v692
    %v729 = vunpack.c.l.b16 %v693
    %v730 = vunpack.c.l.b16 %v694
    %v731 = vunpack.c.l.b16 %v695
    %v732 = vunpack.c.l.b16 %v696
    %v733 = vpack.c.b16 %v718, %v717
    %v734 = vpack.c.b16 %v720, %v719
    %v735 = vpack.c.b16 %v722, %v721
    %v736 = vpack.c.b16 %v724, %v723
    %v737 = vpack.c.b16 %v726, %v725
    %v738 = vpack.c.b16 %v728, %v727
    %v739 = vpack.c.b16 %v730, %v729
    %v740 = vpack.c.b16 %v732, %v731
    %749 = vmatpush.bf16.msra.mxu0 %v740
    %750 = vmatpush.bf16.msra.mxu0 %v739
    %751 = vmatpush.bf16.msra.mxu0 %v738
    %752 = vmatpush.bf16.msra.mxu0 %v737
    %753 = vmatpush.bf16.msra.mxu0 %v736
    %754 = vmatpush.bf16.msra.mxu0 %v735
    %755 = vmatpush.bf16.msra.mxu0 %v734
    %756 = vmatpush.bf16.msra.mxu0 %v733
    %757 = vmatmul.bf16.gmra.mxu0 %v680
    %v758 = vpop.f32.mrf.mxu0
    %v759 = vadd.f32 %v699, %v758
    %v760 = vpop.f32.mrf.mxu0
    %v761 = vadd.f32 %v699, %v760
    %762 = vdwg.mxu0
    %v763 = vpack.c.bf16 %v759, %v759
    %v764 = vpack.c.bf16 %v761, %v761
    %765 = vst [vmem:[#allocation14] sm:$0xf] %v763
    %766 = vst [vmem:[#allocation14 + $0x4] sm:$0xf] %v764
    // Predicated region
    $region98: #{tpu_custom_call.1} parent=1 // pred_check
      _
    $region99: #{tpu_custom_call.1} parent=1 // pred_check_branch
      %768 = sbr.rel (0) target = $region101
    $region100: #{tpu_custom_call.1} parent=1 // pred_region
      %770 = vsyncadd [#allocation4], 0
      %s771 = sshll.u32 [#allocation14], 4
      %s772 = int_to_ptr.vmem [resolvable:$true] %s771
      %s773 = sshll.u32 %s17, 4
      %s774 = int_to_ptr.hbm [resolvable:$true] %s773
      %779 = dma.vmem_to_hbm [thread:$0]  %s772, 128, %s774, [#allocation4], 64, 64, 4
    $region101: #{tpu_custom_call.1} parent=1 // pred_fallthru
      _
    // Predicated region
    $region102: #{tpu_custom_call.1} parent=1 // pred_check
      _
    $region103: #{tpu_custom_call.1} parent=1 // pred_check_branch
      %781 = sbr.rel (0) target = $region105
    $region104: #{tpu_custom_call.1} parent=1 // pred_region
      %783 = dma.done [#allocation4], 128
    $region105: #{tpu_custom_call.1} parent=1 // pred_fallthru
      _
    %784 = vsyncpa [#allocation3], 1
    %785 = vsyncpa [#allocation6], 1
    %786 = vsyncpa [#allocation9], 1
    %787 = vsyncpa [#allocation12], 1
    %788 = vsyncpa [#allocation4], 1

// kernel: tpu_custom_call.1
$region0: #{tpu_custom_call.1}
  #allocation0 [shape = 'u32[]', space=smem, size = 0x4, offset = 0x4, fixed_abs, tag = 'smem constant byte address 0x4 - core index']
  #allocation1 [shape = 'u32[72,128]{1,0:T(1,128)}', space=vmem, size = 0x9000, scoped, tag = 'internal scratch']
  %s0 = inlined_call_operand.hbm [shape: f32[16,128], index: 0, kind: input, shape index: {}]
  %s1 = inlined_call_operand.hbm [shape: f32[16,128], index: 1, kind: input, shape index: {}]
  %s2 = inlined_call_operand.hbm [shape: bf16[128,128], index: 2, kind: input, shape index: {}]
  %s3 = inlined_call_operand.vmem [shape: f32[1,128], index: 3, kind: input, shape index: {}]
  %s4 = inlined_call_operand.vmem [shape: f32[1,128], index: 4, kind: input, shape index: {}]
  %s5 = inlined_call_operand.vmem [shape: f32[1,128], index: 5, kind: input, shape index: {}]
  %s6 = inlined_call_operand.hbm [shape: bf16[128,128], index: 6, kind: input, shape index: {}]
  %s7 = inlined_call_operand.vmem [shape: f32[1,128], index: 7, kind: input, shape index: {}]
  %s8 = inlined_call_operand.vmem [shape: f32[1,128], index: 8, kind: input, shape index: {}]
  %s9 = inlined_call_operand.vmem [shape: f32[1,128], index: 9, kind: input, shape index: {}]
  %s10 = inlined_call_operand.hbm [shape: bf16[128,128], index: 10, kind: input, shape index: {}]
  %s11 = inlined_call_operand.hbm [shape: bf16[128,128], index: 11, kind: input, shape index: {}]
  %s12 = inlined_call_operand.vmem [shape: f32[1,128], index: 12, kind: input, shape index: {}]
  %s13 = inlined_call_operand.vmem [shape: f32[1,128], index: 13, kind: input, shape index: {}]
  %s14 = inlined_call_operand.vmem [shape: f32[1,128], index: 14, kind: input, shape index: {}]
  %s15 = inlined_call_operand.hbm [shape: bf16[128,128], index: 15, kind: input, shape index: {}]
  %s16 = inlined_call_operand.vmem [shape: f32[1,128], index: 16, kind: input, shape index: {}]
  %s17 = inlined_call_operand.hbm [shape: bf16[16,128], index: 17, kind: output, shape index: {}]
  %s18 = sld [smem:[#allocation0]]
  $region106: #{tpu_custom_call.1} parent=0
    _
  %s20 = ssub.s32 1, %s18
  %s21 = scalar_select 0, %s20, %s18
  $region1: #{tpu_custom_call.1} parent=0
    #allocation2 [shape = 'u8[8192]{0}', space=vmem, size = 0x2000, scoped, tag = 'input window, operand 0, single buffered']
    #allocation3 [shape = 's32[1]{0}', space=sflag, size = 0x4, scoped, tag = 'scoped memory for tpu_custom_call.1']
    #allocation4 [shape = 's32[1]{0}', space=sflag, size = 0x4, scoped, tag = 'scoped memory for tpu_custom_call.1']
    #allocation5 [shape = 'u8[8192]{0}', space=vmem, size = 0x2000, scoped, tag = 'input window, operand 1, single buffered']
    #allocation6 [shape = 's32[1]{0}', space=sflag, size = 0x4, scoped, tag = 'scoped memory for tpu_custom_call.1']
    #allocation7 [shape = 'u8[32768]{0}', space=vmem, size = 0x8000, scoped, tag = 'input window, operand 2, single buffered']
    #allocation8 [shape = 'u8[32768]{0}', space=vmem, size = 0x8000, scoped, tag = 'input window, operand 6, single buffered']
    #allocation9 [shape = 's32[1]{0}', space=sflag, size = 0x4, scoped, tag = 'scoped memory for tpu_custom_call.1']
    #allocation10 [shape = 'u8[32768]{0}', space=vmem, size = 0x8000, scoped, tag = 'input window, operand 10, single buffered']
    #allocation11 [shape = 'u8[32768]{0}', space=vmem, size = 0x8000, scoped, tag = 'input window, operand 11, single buffered']
    #allocation12 [shape = 's32[1]{0}', space=sflag, size = 0x4, scoped, tag = 'scoped memory for tpu_custom_call.1']
    #allocation13 [shape = 'u8[32768]{0}', space=vmem, size = 0x8000, scoped, tag = 'input window, operand 15, single buffered']
    #allocation14 [shape = 'u8[4096]{0}', space=vmem, size = 0x1000, scoped, tag = 'output window, operand 0, single buffered']
    %22 = vsyncpa [#allocation3], 0
    %23 = vsyncpa [#allocation6], 0
    %24 = vsyncpa [#allocation9], 0
    %25 = vsyncpa [#allocation12], 0
    %26 = vsyncpa [#allocation4], 0
    // Predicated region
    $region2: #{tpu_custom_call.1} parent=1 // pred_check
      _
    $region3: #{tpu_custom_call.1} parent=1 // pred_check_branch
      %28 = sbr.rel (0) target = $region5
    $region4: #{tpu_custom_call.1} parent=1 // pred_region
      %30 = vsyncadd [#allocation3], 0
      %s31 = sshll.u32 %s0, 4
      %s32 = int_to_ptr.hbm [resolvable:$true] %s31
      %s33 = sshll.u32 [#allocation2], 4
      %s34 = int_to_ptr.vmem [resolvable:$true] %s33
      %39 = dma.hbm_to_vmem [thread:$0]  %s32, 256, %s34, [#allocation3], 128, 128, 8
    $region5: #{tpu_custom_call.1} parent=1 // pred_fallthru
      _
    // Predicated region
    $region6: #{tpu_custom_call.1} parent=1 // pred_check
      _
    $region7: #{tpu_custom_call.1} parent=1 // pred_check_branch
      %41 = sbr.rel (0) target = $region9
    $region8: #{tpu_custom_call.1} parent=1 // pred_region
      %43 = vsyncadd [#allocation6], 0
      %s44 = sshll.u32 %s1, 4
      %s45 = int_to_ptr.hbm [resolvable:$true] %s44
      %s46 = sshll.u32 [#allocation5], 4
      %s47 = int_to_ptr.vmem [resolvable:$true] %s46
      %52 = dma.hbm_to_vmem [thread:$0]  %s45, 256, %s47, [#allocation6], 128, 128, 8
    $region9: #{tpu_custom_call.1} parent=1 // pred_fallthru
      _
    // Predicated region
    $region10: #{tpu_custom_call.1} parent=1 // pred_check
      _
    $region11: #{tpu_custom_call.1} parent=1 // pred_check_branch
      %54 = sbr.rel (0) target = $region13
    $region12: #{tpu_custom_call.1} parent=1 // pred_region
      %56 = vsyncadd [#allocation6], 0
      %s57 = sshll.u32 %s2, 4
      %s58 = int_to_ptr.hbm [resolvable:$true] %s57
      %s59 = sshll.u32 [#allocation7], 4
      %s60 = int_to_ptr.vmem [resolvable:$true] %s59
      %65 = dma.hbm_to_vmem [thread:$0]  %s58, 1024, %s60, [#allocation6], 64, 64, 4
    $region13: #{tpu_custom_call.1} parent=1 // pred_fallthru
      _
    // Predicated region
    $region14: #{tpu_custom_call.1} parent=1 // pred_check
      _
    $region15: #{tpu_custom_call.1} parent=1 // pred_check_branch
      %67 = sbr.rel (0) target = $region17
    $region16: #{tpu_custom_call.1} parent=1 // pred_region
      _
    $region17: #{tpu_custom_call.1} parent=1 // pred_fallthru
      _
    // Predicated region
    $region18: #{tpu_custom_call.1} parent=1 // pred_check
      _
    $region19: #{tpu_custom_call.1} parent=1 // pred_check_branch
      %69 = sbr.rel (0) target = $region21
    $region20: #{tpu_custom_call.1} parent=1 // pred_region
      _
    $region21: #{tpu_custom_call.1} parent=1 // pred_fallthru
      _
    // Predicated region
    $region22: #{tpu_custom_call.1} parent=1 // pred_check
      _
    $region23: #{tpu_custom_call.1} parent=1 // pred_check_branch
      %71 = sbr.rel (0) target = $region25
    $region24: #{tpu_custom_call.1} parent=1 // pred_region
      _
    $region25: #{tpu_custom_call.1} parent=1 // pred_fallthru
      _
    // Predicated region
    $region26: #{tpu_custom_call.1} parent=1 // pred_check
      _
    $region27: #{tpu_custom_call.1} parent=1 // pred_check_branch
      %73 = sbr.rel (0) target = $region29
    $region28: #{tpu_custom_call.1} parent=1 // pred_region
      %75 = vsyncadd [#allocation9], 0
      %s76 = sshll.u32 %s6, 4
      %s77 = int_to_ptr.hbm [resolvable:$true] %s76
      %s78 = sshll.u32 [#allocation8], 4
      %s79 = int_to_ptr.vmem [resolvable:$true] %s78
      %84 = dma.hbm_to_vmem [thread:$0]  %s77, 1024, %s79, [#allocation9], 64, 64, 4
    $region29: #{tpu_custom_call.1} parent=1 // pred_fallthru
      _
    // Predicated region
    $region30: #{tpu_custom_call.1} parent=1 // pred_check
      _
    $region31: #{tpu_custom_call.1} parent=1 // pred_check_branch
      %86 = sbr.rel (0) target = $region33
    $region32: #{tpu_custom_call.1} parent=1 // pred_region
      _
    $region33: #{tpu_custom_call.1} parent=1 // pred_fallthru
      _
    // Predicated region
    $region34: #{tpu_custom_call.1} parent=1 // pred_check
      _
    $region35: #{tpu_custom_call.1} parent=1 // pred_check_branch
      %88 = sbr.rel (0) target = $region37
    $region36: #{tpu_custom_call.1} parent=1 // pred_region
      _
    $region37: #{tpu_custom_call.1} parent=1 // pred_fallthru
      _
    // Predicated region
    $region38: #{tpu_custom_call.1} parent=1 // pred_check
      _
    $region39: #{tpu_custom_call.1} parent=1 // pred_check_branch
      %90 = sbr.rel (0) target = $region41
    $region40: #{tpu_custom_call.1} parent=1 // pred_region
      _
    $region41: #{tpu_custom_call.1} parent=1 // pred_fallthru
      _
    // Predicated region
    $region42: #{tpu_custom_call.1} parent=1 // pred_check
      _
    $region43: #{tpu_custom_call.1} parent=1 // pred_check_branch
      %92 = sbr.rel (0) target = $region45
    $region44: #{tpu_custom_call.1} parent=1 // pred_region
      %94 = vsyncadd [#allocation9], 0
      %s95 = sshll.u32 %s10, 4
      %s96 = int_to_ptr.hbm [resolvable:$true] %s95
      %s97 = sshll.u32 [#allocation10], 4
      %s98 = int_to_ptr.vmem [resolvable:$true] %s97
      %103 = dma.hbm_to_vmem [thread:$0]  %s96, 1024, %s98, [#allocation9], 64, 64, 4
    $region45: #{tpu_custom_call.1} parent=1 // pred_fallthru
      _
    // Predicated region
    $region46: #{tpu_custom_call.1} parent=1 // pred_check
      _
    $region47: #{tpu_custom_call.1} parent=1 // pred_check_branch
      %105 = sbr.rel (0) target = $region49
    $region48: #{tpu_custom_call.1} parent=1 // pred_region
      %107 = vsyncadd [#allocation12], 0
      %s108 = sshll.u32 %s11, 4
      %s109 = int_to_ptr.hbm [resolvable:$true] %s108
      %s110 = sshll.u32 [#allocation11], 4
      %s111 = int_to_ptr.vmem [resolvable:$true] %s110
      %116 = dma.hbm_to_vmem [thread:$0]  %s109, 1024, %s111, [#allocation12], 64, 64, 4
    $region49: #{tpu_custom_call.1} parent=1 // pred_fallthru
      _
    // Predicated region
    $region50: #{tpu_custom_call.1} parent=1 // pred_check
      _
    $region51: #{tpu_custom_call.1} parent=1 // pred_check_branch
      %118 = sbr.rel (0) target = $region53
    $region52: #{tpu_custom_call.1} parent=1 // pred_region
      _
    $region53: #{tpu_custom_call.1} parent=1 // pred_fallthru
      _
    // Predicated region
    $region54: #{tpu_custom_call.1} parent=1 // pred_check
      _
    $region55: #{tpu_custom_call.1} parent=1 // pred_check_branch
      %120 = sbr.rel (0) target = $region57
    $region56: #{tpu_custom_call.1} parent=1 // pred_region
      _
    $region57: #{tpu_custom_call.1} parent=1 // pred_fallthru
      _
    // Predicated region
    $region58: #{tpu_custom_call.1} parent=1 // pred_check
      _
    $region59: #{tpu_custom_call.1} parent=1 // pred_check_branch
      %122 = sbr.rel (0) target = $region61
    $region60: #{tpu_custom_call.1} parent=1 // pred_region
      _
    $region61: #{tpu_custom_call.1} parent=1 // pred_fallthru
      _
    // Predicated region
    $region62: #{tpu_custom_call.1} parent=1 // pred_check
      _
    $region63: #{tpu_custom_call.1} parent=1 // pred_check_branch
      %124 = sbr.rel (0) target = $region65
    $region64: #{tpu_custom_call.1} parent=1 // pred_region
      %126 = vsyncadd [#allocation12], 0
      %s127 = sshll.u32 %s15, 4
      %s128 = int_to_ptr.hbm [resolvable:$true] %s127
      %s129 = sshll.u32 [#allocation13], 4
      %s130 = int_to_ptr.vmem [resolvable:$true] %s129
      %135 = dma.hbm_to_vmem [thread:$0]  %s128, 1024, %s130, [#allocation12], 64, 64, 4
    $region65: #{tpu_custom_call.1} parent=1 // pred_fallthru
      _
    // Predicated region
    $region66: #{tpu_custom_call.1} parent=1 // pred_check
      _
    $region67: #{tpu_custom_call.1} parent=1 // pred_check_branch
      %137 = sbr.rel (0) target = $region69
    $region68: #{tpu_custom_call.1} parent=1 // pred_region
      _
    $region69: #{tpu_custom_call.1} parent=1 // pred_fallthru
      _
    // Predicated region
    $region70: #{tpu_custom_call.1} parent=1 // pred_check
      _
    $region71: #{tpu_custom_call.1} parent=1 // pred_check_branch
      %139 = sbr.rel (0) target = $region73
    $region72: #{tpu_custom_call.1} parent=1 // pred_region
      %141 = dma.done [#allocation3], 256
    $region73: #{tpu_custom_call.1} parent=1 // pred_fallthru
      _
    // Predicated region
    $region74: #{tpu_custom_call.1} parent=1 // pred_check
      _
    $region75: #{tpu_custom_call.1} parent=1 // pred_check_branch
      %143 = sbr.rel (0) target = $region77
    $region76: #{tpu_custom_call.1} parent=1 // pred_region
      %145 = dma.done [#allocation6], 256
    $region77: #{tpu_custom_call.1} parent=1 // pred_fallthru
      _
    // Predicated region
    $region78: #{tpu_custom_call.1} parent=1 // pred_check
      _
    $region79: #{tpu_custom_call.1} parent=1 // pred_check_branch
      %147 = sbr.rel (0) target = $region81
    $region80: #{tpu_custom_call.1} parent=1 // pred_region
      %149 = dma.done [#allocation6], 1024
    $region81: #{tpu_custom_call.1} parent=1 // pred_fallthru
      _
    // Predicated region
    $region82: #{tpu_custom_call.1} parent=1 // pred_check
      _
    $region83: #{tpu_custom_call.1} parent=1 // pred_check_branch
      %151 = sbr.rel (0) target = $region85
    $region84: #{tpu_custom_call.1} parent=1 // pred_region
      %153 = dma.done [#allocation9], 1024
    $region85: #{tpu_custom_call.1} parent=1 // pred_fallthru
      _
    // Predicated region
    $region86: #{tpu_custom_call.1} parent=1 // pred_check
      _
    $region87: #{tpu_custom_call.1} parent=1 // pred_check_branch
      %155 = sbr.rel (0) target = $region89
    $region88: #{tpu_custom_call.1} parent=1 // pred_region
      %157 = dma.done [#allocation9], 1024
    $region89: #{tpu_custom_call.1} parent=1 // pred_fallthru
      _
    // Predicated region
    $region90: #{tpu_custom_call.1} parent=1 // pred_check
      _
    $region91: #{tpu_custom_call.1} parent=1 // pred_check_branch
      %159 = sbr.rel (0) target = $region93
    $region92: #{tpu_custom_call.1} parent=1 // pred_region
      %161 = dma.done [#allocation12], 1024
    $region93: #{tpu_custom_call.1} parent=1 // pred_fallthru
      _
    // Predicated region
    $region94: #{tpu_custom_call.1} parent=1 // pred_check
      _
    $region95: #{tpu_custom_call.1} parent=1 // pred_check_branch
      %163 = sbr.rel (0) target = $region97
    $region96: #{tpu_custom_call.1} parent=1 // pred_region
      %165 = dma.done [#allocation12], 1024
    $region97: #{tpu_custom_call.1} parent=1 // pred_fallthru
      _
    %v166 = vld [vmem:[#allocation2] sm:$0xff]
    %v167 = vld [vmem:[#allocation2 + $0x8] sm:$0xff]
    %v168 = vpack.c.bf16 %v167, %v166
    %v169 = vld [vmem:[#allocation5] sm:$0xff]
    %v170 = vld [vmem:[#allocation5 + $0x8] sm:$0xff]
    %v171 = vpack.c.bf16 %v170, %v169
    %v172 = vld [vmem:[#allocation7] sm:$0xf]
    %v173 = vld [vmem:[#allocation7 + $0x4] sm:$0xf]
    %v174 = vld [vmem:[#allocation7 + $0x8] sm:$0xf]
    %v175 = vld [vmem:[#allocation7 + $0xc] sm:$0xf]
    %v176 = vld [vmem:[#allocation7 + $0x10] sm:$0xf]
    %v177 = vld [vmem:[#allocation7 + $0x14] sm:$0xf]
    %v178 = vld [vmem:[#allocation7 + $0x18] sm:$0xf]
    %v179 = vld [vmem:[#allocation7 + $0x1c] sm:$0xf]
    %v180 = vld [vmem:[#allocation7 + $0x20] sm:$0xf]
    %v181 = vld [vmem:[#allocation7 + $0x24] sm:$0xf]
    %v182 = vld [vmem:[#allocation7 + $0x28] sm:$0xf]
    %v183 = vld [vmem:[#allocation7 + $0x2c] sm:$0xf]
    %v184 = vld [vmem:[#allocation7 + $0x30] sm:$0xf]
    %v185 = vld [vmem:[#allocation7 + $0x34] sm:$0xf]
    %v186 = vld [vmem:[#allocation7 + $0x38] sm:$0xf]
    %v187 = vld [vmem:[#allocation7 + $0x3c] sm:$0xf]
    %v188 = vld [vmem:[%s3] sm:$0x1]
    %v190 = vperm.slane %v188, 0
    %v208 = vunpack.c.l.b16 %v172
    %v209 = vunpack.c.l.b16 %v173
    %v210 = vunpack.c.l.b16 %v174
    %v211 = vunpack.c.l.b16 %v175
    %v212 = vunpack.c.l.b16 %v176
    %v213 = vunpack.c.l.b16 %v177
    %v214 = vunpack.c.l.b16 %v178
    %v215 = vunpack.c.l.b16 %v179
    %v216 = vunpack.c.l.b16 %v180
    %v217 = vunpack.c.l.b16 %v181
    %v218 = vunpack.c.l.b16 %v182
    %v219 = vunpack.c.l.b16 %v183
    %v220 = vunpack.c.l.b16 %v184
    %v221 = vunpack.c.l.b16 %v185
    %v222 = vunpack.c.l.b16 %v186
    %v223 = vunpack.c.l.b16 %v187
    %v224 = vpack.c.b16 %v209, %v208
    %v225 = vpack.c.b16 %v211, %v210
    %v226 = vpack.c.b16 %v213, %v212
    %v227 = vpack.c.b16 %v215, %v214
    %v228 = vpack.c.b16 %v217, %v216
    %v229 = vpack.c.b16 %v219, %v218
    %v230 = vpack.c.b16 %v221, %v220
    %v231 = vpack.c.b16 %v223, %v222
    %240 = vmatpush.bf16.msra.mxu0 %v231
    %241 = vmatpush.bf16.msra.mxu0 %v230
    %242 = vmatpush.bf16.msra.mxu0 %v229
    %243 = vmatpush.bf16.msra.mxu0 %v228
    %244 = vmatpush.bf16.msra.mxu0 %v227
    %245 = vmatpush.bf16.msra.mxu0 %v226
    %246 = vmatpush.bf16.msra.mxu0 %v225
    %247 = vmatpush.bf16.msra.mxu0 %v224
    %248 = vmatmul.bf16.gmra.mxu0 %v168
    %v249 = vpop.f32.mrf.mxu0
    %v250 = vadd.f32 %v190, %v249
    %v251 = vpop.f32.mrf.mxu0
    %v252 = vadd.f32 %v190, %v251
    %253 = vdwg.mxu0
    %v254 = vld [vmem:[%s4] sm:$0x1]
    %v255 = vld [vmem:[%s5] sm:$0x1]
    %256 = vadd.xlane.f32.xlu0 %v250
    %v257 = vpop.xlane.xlu0 %256
    %258 = vadd.xlane.f32.xlu0 %v252
    %v259 = vpop.xlane.xlu0 %258
    %v260 = vmul.f32 %v250, %v250
    %v261 = vmul.f32 %v252, %v252
    %262 = vadd.xlane.f32.xlu0 %v260
    %v263 = vpop.xlane.xlu0 %262
    %264 = vadd.xlane.f32.xlu0 %v261
    %v265 = vpop.xlane.xlu0 %264
    %v266 = vmul.f32 %v257, 0.015625
    %v267 = vmul.f32 %v259, 0.015625
    %v268 = vmul.f32 %v263, 0.015625
    %v269 = vmul.f32 %v265, 0.015625
    %v270 = vmul.f32 %v266, %v266
    %v271 = vmul.f32 %v267, %v267
    %v272 = vsub.f32 %v268, %v270
    %v273 = vsub.f32 %v269, %v271
    %v274 = vmax.f32 %v272, 0.0
    %v275 = vmax.f32 %v273, 0.0
    %v276 = vsub.f32 %v250, %v266
    %v277 = vsub.f32 %v252, %v267
    %v278 = vadd.f32 %v274, 1e-05
    %v279 = vadd.f32 %v275, 1e-05
    %v280 = vrsqrt.pop %v278
    %v281 = vmul.f32 %v280, %v278
    %v282 = vmul.f32 %v281, %v280
    %v283 = vmul.f32 0.5, %v282
    %v284 = vsub.f32 1.5, %v283
    %v285 = vmul.f32 %v280, %v284
    %vm286 = vweird.f32 %v278
    %vm287 = vweird.f32 %v280
    %vm288 = vmor %vm286, %vm287
    %v289 = vsel %vm288, %v280, %v285
    %v290 = vrsqrt.pop %v279
    %v291 = vmul.f32 %v290, %v279
    %v292 = vmul.f32 %v291, %v290
    %v293 = vmul.f32 0.5, %v292
    %v294 = vsub.f32 1.5, %v293
    %v295 = vmul.f32 %v290, %v294
    %vm296 = vweird.f32 %v279
    %vm297 = vweird.f32 %v290
    %vm298 = vmor %vm296, %vm297
    %v299 = vsel %vm298, %v290, %v295
    %v300 = vmul.f32 %v276, %v289
    %v301 = vmul.f32 %v277, %v299
    %v303 = vperm.slane %v254, 0
    %v305 = vmul.f32 %v300, %v303
    %v306 = vmul.f32 %v301, %v303
    %v308 = vperm.slane %v255, 0
    %v310 = vadd.f32 %v305, %v308
    %v311 = vadd.f32 %v306, %v308
    %v312 = vmax.f32 %v310, 0.0
    %v313 = vmax.f32 %v311, 0.0
    %v314 = vpack.c.bf16 %v313, %v312
    %v315 = vld [vmem:[#allocation8] sm:$0xf]
    %v316 = vld [vmem:[#allocation8 + $0x4] sm:$0xf]
    %v317 = vld [vmem:[#allocation8 + $0x8] sm:$0xf]
    %v318 = vld [vmem:[#allocation8 + $0xc] sm:$0xf]
    %v319 = vld [vmem:[#allocation8 + $0x10] sm:$0xf]
    %v320 = vld [vmem:[#allocation8 + $0x14] sm:$0xf]
    %v321 = vld [vmem:[#allocation8 + $0x18] sm:$0xf]
    %v322 = vld [vmem:[#allocation8 + $0x1c] sm:$0xf]
    %v323 = vld [vmem:[#allocation8 + $0x20] sm:$0xf]
    %v324 = vld [vmem:[#allocation8 + $0x24] sm:$0xf]
    %v325 = vld [vmem:[#allocation8 + $0x28] sm:$0xf]
    %v326 = vld [vmem:[#allocation8 + $0x2c] sm:$0xf]
    %v327 = vld [vmem:[#allocation8 + $0x30] sm:$0xf]
    %v328 = vld [vmem:[#allocation8 + $0x34] sm:$0xf]
    %v329 = vld [vmem:[#allocation8 + $0x38] sm:$0xf]
    %v330 = vld [vmem:[#allocation8 + $0x3c] sm:$0xf]
    %v331 = vld [vmem:[%s7] sm:$0x1]
    %v333 = vperm.slane %v331, 0
    %v351 = vunpack.c.l.b16 %v315
    %v352 = vunpack.c.l.b16 %v316
    %v353 = vunpack.c.l.b16 %v317
    %v354 = vunpack.c.l.b16 %v318
    %v355 = vunpack.c.l.b16 %v319
    %v356 = vunpack.c.l.b16 %v320
    %v357 = vunpack.c.l.b16 %v321
    %v358 = vunpack.c.l.b16 %v322
    %v359 = vunpack.c.l.b16 %v323
    %v360 = vunpack.c.l.b16 %v324
    %v361 = vunpack.c.l.b16 %v325
    %v362 = vunpack.c.l.b16 %v326
    %v363 = vunpack.c.l.b16 %v327
    %v364 = vunpack.c.l.b16 %v328
    %v365 = vunpack.c.l.b16 %v329
    %v366 = vunpack.c.l.b16 %v330
    %v367 = vpack.c.b16 %v352, %v351
    %v368 = vpack.c.b16 %v354, %v353
    %v369 = vpack.c.b16 %v356, %v355
    %v370 = vpack.c.b16 %v358, %v357
    %v371 = vpack.c.b16 %v360, %v359
    %v372 = vpack.c.b16 %v362, %v361
    %v373 = vpack.c.b16 %v364, %v363
    %v374 = vpack.c.b16 %v366, %v365
    %383 = vmatpush.bf16.msra.mxu0 %v374
    %384 = vmatpush.bf16.msra.mxu0 %v373
    %385 = vmatpush.bf16.msra.mxu0 %v372
    %386 = vmatpush.bf16.msra.mxu0 %v371
    %387 = vmatpush.bf16.msra.mxu0 %v370
    %388 = vmatpush.bf16.msra.mxu0 %v369
    %389 = vmatpush.bf16.msra.mxu0 %v368
    %390 = vmatpush.bf16.msra.mxu0 %v367
    %391 = vmatmul.bf16.gmra.mxu0 %v171
    %v392 = vpop.f32.mrf.mxu0
    %v393 = vadd.f32 %v333, %v392
    %v394 = vpop.f32.mrf.mxu0
    %v395 = vadd.f32 %v333, %v394
    %396 = vdwg.mxu0
    %v397 = vld [vmem:[%s8] sm:$0x1]
    %v398 = vld [vmem:[%s9] sm:$0x1]
    %399 = vadd.xlane.f32.xlu0 %v393
    %v400 = vpop.xlane.xlu0 %399
    %401 = vadd.xlane.f32.xlu0 %v395
    %v402 = vpop.xlane.xlu0 %401
    %v403 = vmul.f32 %v393, %v393
    %v404 = vmul.f32 %v395, %v395
    %405 = vadd.xlane.f32.xlu0 %v403
    %v406 = vpop.xlane.xlu0 %405
    %407 = vadd.xlane.f32.xlu0 %v404
    %v408 = vpop.xlane.xlu0 %407
    %v409 = vmul.f32 %v400, 0.015625
    %v410 = vmul.f32 %v402, 0.015625
    %v411 = vmul.f32 %v406, 0.015625
    %v412 = vmul.f32 %v408, 0.015625
    %v413 = vmul.f32 %v409, %v409
    %v414 = vmul.f32 %v410, %v410
    %v415 = vsub.f32 %v411, %v413
    %v416 = vsub.f32 %v412, %v414
    %v417 = vmax.f32 %v415, 0.0
    %v418 = vmax.f32 %v416, 0.0
    %v419 = vsub.f32 %v393, %v409
    %v420 = vsub.f32 %v395, %v410
    %v421 = vadd.f32 %v417, 1e-05
    %v422 = vadd.f32 %v418, 1e-05
    %v423 = vrsqrt.pop %v421
    %v424 = vmul.f32 %v423, %v421
    %v425 = vmul.f32 %v424, %v423
    %v426 = vmul.f32 0.5, %v425
    %v427 = vsub.f32 1.5, %v426
    %v428 = vmul.f32 %v423, %v427
    %vm429 = vweird.f32 %v421
    %vm430 = vweird.f32 %v423
    %vm431 = vmor %vm429, %vm430
    %v432 = vsel %vm431, %v423, %v428
    %v433 = vrsqrt.pop %v422
    %v434 = vmul.f32 %v433, %v422
    %v435 = vmul.f32 %v434, %v433
    %v436 = vmul.f32 0.5, %v435
    %v437 = vsub.f32 1.5, %v436
    %v438 = vmul.f32 %v433, %v437
    %vm439 = vweird.f32 %v422
    %vm440 = vweird.f32 %v433
    %vm441 = vmor %vm439, %vm440
    %v442 = vsel %vm441, %v433, %v438
    %v443 = vmul.f32 %v419, %v432
    %v444 = vmul.f32 %v420, %v442
    %v446 = vperm.slane %v397, 0
    %v448 = vmul.f32 %v443, %v446
    %v449 = vmul.f32 %v444, %v446
    %v451 = vperm.slane %v398, 0
    %v453 = vadd.f32 %v448, %v451
    %v454 = vadd.f32 %v449, %v451
    %v455 = vmax.f32 %v453, 0.0
    %v456 = vmax.f32 %v454, 0.0
    %v457 = vpack.c.bf16 %v456, %v455
    %v458 = vld [vmem:[#allocation10] sm:$0xf]
    %v459 = vld [vmem:[#allocation10 + $0x4] sm:$0xf]
    %v460 = vld [vmem:[#allocation10 + $0x8] sm:$0xf]
    %v461 = vld [vmem:[#allocation10 + $0xc] sm:$0xf]
    %v462 = vld [vmem:[#allocation10 + $0x10] sm:$0xf]
    %v463 = vld [vmem:[#allocation10 + $0x14] sm:$0xf]
    %v464 = vld [vmem:[#allocation10 + $0x18] sm:$0xf]
    %v465 = vld [vmem:[#allocation10 + $0x1c] sm:$0xf]
    %v466 = vld [vmem:[#allocation10 + $0x20] sm:$0xf]
    %v467 = vld [vmem:[#allocation10 + $0x24] sm:$0xf]
    %v468 = vld [vmem:[#allocation10 + $0x28] sm:$0xf]
    %v469 = vld [vmem:[#allocation10 + $0x2c] sm:$0xf]
    %v470 = vld [vmem:[#allocation10 + $0x30] sm:$0xf]
    %v471 = vld [vmem:[#allocation10 + $0x34] sm:$0xf]
    %v472 = vld [vmem:[#allocation10 + $0x38] sm:$0xf]
    %v473 = vld [vmem:[#allocation10 + $0x3c] sm:$0xf]
    %v474 = vld [vmem:[#allocation11] sm:$0xf]
    %v475 = vld [vmem:[#allocation11 + $0x4] sm:$0xf]
    %v476 = vld [vmem:[#allocation11 + $0x8] sm:$0xf]
    %v477 = vld [vmem:[#allocation11 + $0xc] sm:$0xf]
    %v478 = vld [vmem:[#allocation11 + $0x10] sm:$0xf]
    %v479 = vld [vmem:[#allocation11 + $0x14] sm:$0xf]
    %v480 = vld [vmem:[#allocation11 + $0x18] sm:$0xf]
    %v481 = vld [vmem:[#allocation11 + $0x1c] sm:$0xf]
    %v482 = vld [vmem:[#allocation11 + $0x20] sm:$0xf]
    %v483 = vld [vmem:[#allocation11 + $0x24] sm:$0xf]
    %v484 = vld [vmem:[#allocation11 + $0x28] sm:$0xf]
    %v485 = vld [vmem:[#allocation11 + $0x2c] sm:$0xf]
    %v486 = vld [vmem:[#allocation11 + $0x30] sm:$0xf]
    %v487 = vld [vmem:[#allocation11 + $0x34] sm:$0xf]
    %v488 = vld [vmem:[#allocation11 + $0x38] sm:$0xf]
    %v489 = vld [vmem:[#allocation11 + $0x3c] sm:$0xf]
    %v506 = vunpack.c.l.b16 %v474
    %v507 = vunpack.c.l.b16 %v475
    %v508 = vunpack.c.l.b16 %v476
    %v509 = vunpack.c.l.b16 %v477
    %v510 = vunpack.c.l.b16 %v478
    %v511 = vunpack.c.l.b16 %v479
    %v512 = vunpack.c.l.b16 %v480
    %v513 = vunpack.c.l.b16 %v481
    %v514 = vunpack.c.l.b16 %v482
    %v515 = vunpack.c.l.b16 %v483
    %v516 = vunpack.c.l.b16 %v484
    %v517 = vunpack.c.l.b16 %v485
    %v518 = vunpack.c.l.b16 %v486
    %v519 = vunpack.c.l.b16 %v487
    %v520 = vunpack.c.l.b16 %v488
    %v521 = vunpack.c.l.b16 %v489
    %v522 = vpack.c.b16 %v507, %v506
    %v523 = vpack.c.b16 %v509, %v508
    %v524 = vpack.c.b16 %v511, %v510
    %v525 = vpack.c.b16 %v513, %v512
    %v526 = vpack.c.b16 %v515, %v514
    %v527 = vpack.c.b16 %v517, %v516
    %v528 = vpack.c.b16 %v519, %v518
    %v529 = vpack.c.b16 %v521, %v520
    %538 = vmatpush.bf16.msra.mxu0 %v529
    %539 = vmatpush.bf16.msra.mxu0 %v528
    %540 = vmatpush.bf16.msra.mxu0 %v527
    %541 = vmatpush.bf16.msra.mxu0 %v526
    %542 = vmatpush.bf16.msra.mxu0 %v525
    %543 = vmatpush.bf16.msra.mxu0 %v524
    %544 = vmatpush.bf16.msra.mxu0 %v523
    %545 = vmatpush.bf16.msra.mxu0 %v522
    %546 = vmatmul.bf16.gmra.mxu0 %v457
    %v547 = vpop.f32.mrf.mxu0
    %v548 = vadd.f32 0.0, %v547
    %v549 = vpop.f32.mrf.mxu0
    %v550 = vadd.f32 0.0, %v549
    %551 = vdwg.mxu0
    %v568 = vunpack.c.l.b16 %v458
    %v569 = vunpack.c.l.b16 %v459
    %v570 = vunpack.c.l.b16 %v460
    %v571 = vunpack.c.l.b16 %v461
    %v572 = vunpack.c.l.b16 %v462
    %v573 = vunpack.c.l.b16 %v463
    %v574 = vunpack.c.l.b16 %v464
    %v575 = vunpack.c.l.b16 %v465
    %v576 = vunpack.c.l.b16 %v466
    %v577 = vunpack.c.l.b16 %v467
    %v578 = vunpack.c.l.b16 %v468
    %v579 = vunpack.c.l.b16 %v469
    %v580 = vunpack.c.l.b16 %v470
    %v581 = vunpack.c.l.b16 %v471
    %v582 = vunpack.c.l.b16 %v472
    %v583 = vunpack.c.l.b16 %v473
    %v584 = vpack.c.b16 %v569, %v568
    %v585 = vpack.c.b16 %v571, %v570
    %v586 = vpack.c.b16 %v573, %v572
    %v587 = vpack.c.b16 %v575, %v574
    %v588 = vpack.c.b16 %v577, %v576
    %v589 = vpack.c.b16 %v579, %v578
    %v590 = vpack.c.b16 %v581, %v580
    %v591 = vpack.c.b16 %v583, %v582
    %600 = vmatpush.bf16.msra.mxu0 %v591
    %601 = vmatpush.bf16.msra.mxu0 %v590
    %602 = vmatpush.bf16.msra.mxu0 %v589
    %603 = vmatpush.bf16.msra.mxu0 %v588
    %604 = vmatpush.bf16.msra.mxu0 %v587
    %605 = vmatpush.bf16.msra.mxu0 %v586
    %606 = vmatpush.bf16.msra.mxu0 %v585
    %607 = vmatpush.bf16.msra.mxu0 %v584
    %608 = vmatmul.bf16.gmra.mxu0 %v314
    %v609 = vpop.f32.mrf.mxu0
    %v610 = vadd.f32 %v548, %v609
    %v611 = vpop.f32.mrf.mxu0
    %v612 = vadd.f32 %v550, %v611
    %613 = vdwg.mxu0
    %v614 = vld [vmem:[%s12] sm:$0x1]
    %v616 = vperm.slane %v614, 0
    %v618 = vadd.f32 %v610, %v616
    %v619 = vadd.f32 %v612, %v616
    %v620 = vld [vmem:[%s13] sm:$0x1]
    %v621 = vld [vmem:[%s14] sm:$0x1]
    %622 = vadd.xlane.f32.xlu0 %v618
    %v623 = vpop.xlane.xlu0 %622
    %624 = vadd.xlane.f32.xlu0 %v619
    %v625 = vpop.xlane.xlu0 %624
    %v626 = vmul.f32 %v618, %v618
    %v627 = vmul.f32 %v619, %v619
    %628 = vadd.xlane.f32.xlu0 %v626
    %v629 = vpop.xlane.xlu0 %628
    %630 = vadd.xlane.f32.xlu0 %v627
    %v631 = vpop.xlane.xlu0 %630
    %v632 = vmul.f32 %v623, 0.015625
    %v633 = vmul.f32 %v625, 0.015625
    %v634 = vmul.f32 %v629, 0.015625
    %v635 = vmul.f32 %v631, 0.015625
    %v636 = vmul.f32 %v632, %v632
    %v637 = vmul.f32 %v633, %v633
    %v638 = vsub.f32 %v634, %v636
    %v639 = vsub.f32 %v635, %v637
    %v640 = vmax.f32 %v638, 0.0
    %v641 = vmax.f32 %v639, 0.0
    %v642 = vsub.f32 %v618, %v632
    %v643 = vsub.f32 %v619, %v633
    %v644 = vadd.f32 %v640, 1e-05
    %v645 = vadd.f32 %v641, 1e-05
    %v646 = vrsqrt.pop %v644
    %v647 = vmul.f32 %v646, %v644
    %v648 = vmul.f32 %v647, %v646
    %v649 = vmul.f32 0.5, %v648
    %v650 = vsub.f32 1.5, %v649
    %v651 = vmul.f32 %v646, %v650
    %vm652 = vweird.f32 %v644
    %vm653 = vweird.f32 %v646
    %vm654 = vmor %vm652, %vm653
    %v655 = vsel %vm654, %v646, %v651
    %v656 = vrsqrt.pop %v645
    %v657 = vmul.f32 %v656, %v645
    %v658 = vmul.f32 %v657, %v656
    %v659 = vmul.f32 0.5, %v658
    %v660 = vsub.f32 1.5, %v659
    %v661 = vmul.f32 %v656, %v660
    %vm662 = vweird.f32 %v645
    %vm663 = vweird.f32 %v656
    %vm664 = vmor %vm662, %vm663
    %v665 = vsel %vm664, %v656, %v661
    %v666 = vmul.f32 %v642, %v655
    %v667 = vmul.f32 %v643, %v665
    %v669 = vperm.slane %v620, 0
    %v671 = vmul.f32 %v666, %v669
    %v672 = vmul.f32 %v667, %v669
    %v674 = vperm.slane %v621, 0
    %v676 = vadd.f32 %v671, %v674
    %v677 = vadd.f32 %v672, %v674
    %v678 = vmax.f32 %v676, 0.0
    %v679 = vmax.f32 %v677, 0.0
    %v680 = vpack.c.bf16 %v679, %v678
    %v681 = vld [vmem:[#allocation13] sm:$0xf]
    %v682 = vld [vmem:[#allocation13 + $0x4] sm:$0xf]
    %v683 = vld [vmem:[#allocation13 + $0x8] sm:$0xf]
    %v684 = vld [vmem:[#allocation13 + $0xc] sm:$0xf]
    %v685 = vld [vmem:[#allocation13 + $0x10] sm:$0xf]
    %v686 = vld [vmem:[#allocation13 + $0x14] sm:$0xf]
    %v687 = vld [vmem:[#allocation13 + $0x18] sm:$0xf]
    %v688 = vld [vmem:[#allocation13 + $0x1c] sm:$0xf]
    %v689 = vld [vmem:[#allocation13 + $0x20] sm:$0xf]
    %v690 = vld [vmem:[#allocation13 + $0x24] sm:$0xf]
    %v691 = vld [vmem:[#allocation13 + $0x28] sm:$0xf]
    %v692 = vld [vmem:[#allocation13 + $0x2c] sm:$0xf]
    %v693 = vld [vmem:[#allocation13 + $0x30] sm:$0xf]
    %v694 = vld [vmem:[#allocation13 + $0x34] sm:$0xf]
    %v695 = vld [vmem:[#allocation13 + $0x38] sm:$0xf]
    %v696 = vld [vmem:[#allocation13 + $0x3c] sm:$0xf]
    %v697 = vld [vmem:[%s16] sm:$0x1]
    %v699 = vperm.slane %v697, 0
    %v717 = vunpack.c.l.b16 %v681
    %v718 = vunpack.c.l.b16 %v682
    %v719 = vunpack.c.l.b16 %v683
    %v720 = vunpack.c.l.b16 %v684
    %v721 = vunpack.c.l.b16 %v685
    %v722 = vunpack.c.l.b16 %v686
    %v723 = vunpack.c.l.b16 %v687
    %v724 = vunpack.c.l.b16 %v688
    %v725 = vunpack.c.l.b16 %v689
    %v726 = vunpack.c.l.b16 %v690
    %v727 = vunpack.c.l.b16 %v691
    %v728 = vunpack.c.l.b16 %v692
    %v729 = vunpack.c.l.b16 %v693
    %v730 = vunpack.c.l.b16 %v694
    %v731 = vunpack.c.l.b16 %v695
    %v732 = vunpack.c.l.b16 %v696
    %v733 = vpack.c.b16 %v718, %v717
    %v734 = vpack.c.b16 %v720, %v719
    %v735 = vpack.c.b16 %v722, %v721
    %v736 = vpack.c.b16 %v724, %v723
    %v737 = vpack.c.b16 %v726, %v725
    %v738 = vpack.c.b16 %v728, %v727
    %v739 = vpack.c.b16 %v730, %v729
    %v740 = vpack.c.b16 %v732, %v731
    %749 = vmatpush.bf16.msra.mxu0 %v740
    %750 = vmatpush.bf16.msra.mxu0 %v739
    %751 = vmatpush.bf16.msra.mxu0 %v738
    %752 = vmatpush.bf16.msra.mxu0 %v737
    %753 = vmatpush.bf16.msra.mxu0 %v736
    %754 = vmatpush.bf16.msra.mxu0 %v735
    %755 = vmatpush.bf16.msra.mxu0 %v734
    %756 = vmatpush.bf16.msra.mxu0 %v733
    %757 = vmatmul.bf16.gmra.mxu0 %v680
    %v758 = vpop.f32.mrf.mxu0
    %v759 = vadd.f32 %v699, %v758
    %v760 = vpop.f32.mrf.mxu0
    %v761 = vadd.f32 %v699, %v760
    %762 = vdwg.mxu0
    %v763 = vpack.c.bf16 %v759, %v759
    %v764 = vpack.c.bf16 %v761, %v761
    %765 = vst [vmem:[#allocation14] sm:$0xf] %v763
    %766 = vst [vmem:[#allocation14 + $0x4] sm:$0xf] %v764
    // Predicated region
    $region98: #{tpu_custom_call.1} parent=1 // pred_check
      _
    $region99: #{tpu_custom_call.1} parent=1 // pred_check_branch
      %768 = sbr.rel (0) target = $region101
    $region100: #{tpu_custom_call.1} parent=1 // pred_region
      %770 = vsyncadd [#allocation4], 0
      %s771 = sshll.u32 [#allocation14], 4
      %s772 = int_to_ptr.vmem [resolvable:$true] %s771
      %s773 = sshll.u32 %s17, 4
      %s774 = int_to_ptr.hbm [resolvable:$true] %s773
      %779 = dma.vmem_to_hbm [thread:$0]  %s772, 128, %s774, [#allocation4], 64, 64, 4
    $region101: #{tpu_custom_call.1} parent=1 // pred_fallthru
      _
    // Predicated region
    $region102: #{tpu_custom_call.1} parent=1 // pred_check
      _
    $region103: #{tpu_custom_call.1} parent=1 // pred_check_branch
      %781 = sbr.rel (0) target = $region105
    $region104: #{tpu_custom_call.1} parent=1 // pred_region
      %783 = dma.done [#allocation4], 128
    $region105: #{tpu_custom_call.1} parent=1 // pred_fallthru
      _
    %784 = vsyncpa [#allocation3], 1
    %785 = vsyncpa [#allocation6], 1
    %786 = vsyncpa [#allocation9], 1
    %787 = vsyncpa [#allocation12], 1
    %788 = vsyncpa [#allocation4], 1

</llo_original>
